<compile_context>
chip_gen: v7x
topology: tpu7x:2x2x1
jax: 0.10.0
libtpu: 0.0.40
codegen_flags: <defaults>
</compile_context>

<pallas_src>
import functools
import math

import jax
import jax.numpy as jnp
from jax.experimental import pallas as pl
from jax.experimental.pallas import tpu as pltpu

D_FEAT = 512       # CLIP feature dim (fixed by the module: Linear(512, 256) etc.)
D_HID = 256        # adapter hidden dim
N_COLOR = 5        # len(color_classes)
N_OBJECT = 10      # len(object_classes)
N_HEAD_PAD = 128   # fused (color | object | zero-pad) head width -> one full lane group

BF16_SUBLANE = 16  # bf16 blocks tile as (16, 128): batch tile must be a multiple of 16


def _round_up(x, m):
    return (x + m - 1) // m * m


def _exact_gelu(x):
    # nn.GELU() default = exact erf-based GELU
    return 0.5 * x * (1.0 + jax.lax.erf(x * (1.0 / math.sqrt(2.0))))


@functools.lru_cache(maxsize=None)
def _vmem_capacity_bytes():
    """Physical VMEM of the attached TPU; conservative fallback = v7x's 64 MiB."""
    try:
        info = pltpu.get_tpu_info()
        for attr in ("vmem_capacity_bytes", "vmem_bytes", "vmem_size_bytes"):
            v = getattr(info, attr, None)
            if v:
                return int(v)
    except Exception:
        pass
    return 64 * 1024 * 1024


def _tile_budget():
    """Generation-dependent (max batch tile, scoped VMEM limit)."""
    vmem = _vmem_capacity_bytes()
    if vmem >= 96 * 1024 * 1024:          # v5e / v6e: 128 MiB physical VMEM
        return 2048, 96 * 1024 * 1024
    return 1024, 48 * 1024 * 1024         # v7x: 64 MiB physical VMEM


def _choose_batch_tile(B, tb_max):
    """Batch tile: multiple of 16 (bf16 sublane packing).  Once B > 16 pick at
    most ~half the padded batch so the grid has >=2 steps and the "parallel"
    batch axis can be sharded across v7x's 2 TensorCores."""
    if B <= BF16_SUBLANE:
        return BF16_SUBLANE
    half = _round_up((B + 1) // 2, BF16_SUBLANE)
    return min(tb_max, half)


def clip_head_kernel(
    img_ref, txt_ref,
    iw1_ref, ib1_ref, iw2_ref, ib2_ref,
    tw1_ref, tb1_ref, tw2_ref, tb2_ref,
    hw_ref, hb_ref,
    head_out_ref, img_out_ref, txt_out_ref,
):
    def adapter(x_bf16, w1_ref, b1_ref, w2_ref, b2_ref):
        # bf16 operands on the MXU, f32 accumulation; elementwise stays f32.
        h = jnp.dot(x_bf16, w1_ref[...],
                    preferred_element_type=jnp.float32) + b1_ref[...]
        h = _exact_gelu(h)
        return jnp.dot(h.astype(jnp.bfloat16), w2_ref[...],
                       preferred_element_type=jnp.float32) + b2_ref[...]

    img_bf = img_ref[...]                      # (TB, 512) bf16
    txt_bf = txt_ref[...]
    img = img_bf.astype(jnp.float32)           # residual base / elementwise in f32
    txt = txt_bf.astype(jnp.float32)

    # residual adapters: x + 0.05 * adapter(x)
    a_img = img + 0.05 * adapter(img_bf, iw1_ref, ib1_ref, iw2_ref, ib2_ref)
    a_txt = txt + 0.05 * adapter(txt_bf, tw1_ref, tb1_ref, tw2_ref, tb2_ref)

    # L2 normalize along feature axis via rsqrt (EUP slot); 1e-12 eps keeps
    # zero-padded batch rows finite (they are sliced off in the wrapper).
    a_img = a_img * jax.lax.rsqrt(
        jnp.sum(a_img * a_img, axis=-1, keepdims=True) + 1e-12)
    a_txt = a_txt * jax.lax.rsqrt(
        jnp.sum(a_txt * a_txt, axis=-1, keepdims=True) + 1e-12)

    # fused classification heads: one lane-dense (TB, 128) matmul + unmasked store
    head_out_ref[...] = (
        jnp.dot(a_img.astype(jnp.bfloat16), hw_ref[...],
                preferred_element_type=jnp.float32) + hb_ref[...]
    )
    # bf16 writeback halves the dominant output HBM traffic.
    img_out_ref[...] = a_img.astype(img_out_ref.dtype)
    txt_out_ref[...] = a_txt.astype(txt_out_ref.dtype)


def init_params(key):
    """Deterministic init of EnhancedCLIPModel parameters (+ encoder stubs).

    All Linear weights are stored transposed, i.e. shape (in, out), so the
    kernel computes x @ W + b (equivalent to PyTorch's x @ W.T + b).
    Adapter weights are stored bf16 (MXU operands, halves weight HBM traffic);
    biases and head weights are kept f32 (heads are fused/padded per call).
    """
    ks = jax.random.split(key, 16)

    def linear(kw, kb, fan_in, fan_out, w_dtype=jnp.float32):
        bound = 1.0 / math.sqrt(fan_in)
        w = jax.random.uniform(kw, (fan_in, fan_out), jnp.float32, -bound, bound)
        b = jax.random.uniform(kb, (1, fan_out), jnp.float32, -bound, bound)
        return w.astype(w_dtype), b

    p = {}
    # image_adapter: Linear(512,256) -> GELU -> Linear(256,512)
    p["iw1"], p["ib1"] = linear(ks[0], ks[1], D_FEAT, D_HID, jnp.bfloat16)
    p["iw2"], p["ib2"] = linear(ks[2], ks[3], D_HID, D_FEAT, jnp.bfloat16)
    # text_adapter
    p["tw1"], p["tb1"] = linear(ks[4], ks[5], D_FEAT, D_HID, jnp.bfloat16)
    p["tw2"], p["tb2"] = linear(ks[6], ks[7], D_HID, D_FEAT, jnp.bfloat16)
    # heads (module parameterization; fused+padded to 128 lanes in the wrapper)
    p["cw"], p["cb"] = linear(ks[8], ks[9], D_FEAT, N_COLOR)
    p["ow"], p["ob"] = linear(ks[10], ks[11], D_FEAT, N_OBJECT)
    # logit_scale is a parameter of the module but unused in forward outputs
    p["logit_scale"] = jnp.asarray(math.log(1.0 / 0.07), jnp.float32)

    # Deterministic stub "CLIP" encoders (placeholders for clip.encode_*).
    p["img_enc_w"] = (
        jax.random.normal(ks[12], (3 * 16 * 16, D_FEAT), jnp.float32) * 0.02
    )
    p["txt_embed"] = jax.random.normal(ks[13], (64, D_FEAT), jnp.float32) * 0.02
    return p


def _encode_stub(images, texts, params):
    """Stub CLIP encoders (glue).  Features are handed to the kernel in bf16 so
    they never round-trip HBM in f32; the first adapter matmul already consumes
    bf16 MXU operands, so compute behavior is unchanged."""
    B = images.shape[0]
    img = images.reshape(B, -1).astype(jnp.float32) @ params["img_enc_w"]
    txt = jnp.mean(params["txt_embed"][texts], axis=1)
    return img.astype(jnp.bfloat16), txt.astype(jnp.bfloat16)


@jax.jit
def enhanced_clip_forward(images, texts, params):
    B = images.shape[0]

    # --- glue: stub CLIP encoders (see TODO above), bf16 feature hand-off ---
    image_features, text_features = _encode_stub(images, texts, params)

    # --- fused lane-dense head: columns [0:5]=color, [5:15]=object, rest zero ---
    hw = jnp.zeros((D_FEAT, N_HEAD_PAD), jnp.float32)
    hw = hw.at[:, :N_COLOR].set(params["cw"])
    hw = hw.at[:, N_COLOR:N_COLOR + N_OBJECT].set(params["ow"])
    hw = hw.astype(jnp.bfloat16)
    hb = jnp.zeros((1, N_HEAD_PAD), jnp.float32)
    hb = hb.at[:, :N_COLOR].set(params["cb"])
    hb = hb.at[:, N_COLOR:N_COLOR + N_OBJECT].set(params["ob"])

    # --- batch tiling: generation-dependent tile cap / VMEM limit ---
    tb_max, vmem_limit = _tile_budget()
    TB = _choose_batch_tile(B, tb_max)
    B_pad = _round_up(B, TB)
    if B_pad != B:
        pad = B_pad - B
        image_features = jnp.pad(image_features, ((0, pad), (0, 0)))
        text_features = jnp.pad(text_features, ((0, pad), (0, 0)))

    grid = (B_pad // TB,)

    feat_spec = pl.BlockSpec((TB, D_FEAT), lambda i: (i, 0))
    head_spec = pl.BlockSpec((TB, N_HEAD_PAD), lambda i: (i, 0))

    def resident(shape):
        # Constant index_map -> the pipeliner fetches these once and keeps them
        # resident in VMEM across batch tiles.  (pl.Buffered(1) would halve
        # their buffer footprint, but VMEM is not tight at these tile sizes, so
        # it is intentionally skipped for compatibility.)
        return pl.BlockSpec(shape, lambda i: (0, 0))

    in_specs = [
        feat_spec, feat_spec,
        resident((D_FEAT, D_HID)), resident((1, D_HID)),
        resident((D_HID, D_FEAT)), resident((1, D_FEAT)),
        resident((D_FEAT, D_HID)), resident((1, D_HID)),
        resident((D_HID, D_FEAT)), resident((1, D_FEAT)),
        resident((D_FEAT, N_HEAD_PAD)), resident((1, N_HEAD_PAD)),
    ]
    out_specs = (head_spec, feat_spec, feat_spec)
    out_shapes = (
        jax.ShapeDtypeStruct((B_pad, N_HEAD_PAD), jnp.float32),   # fused head logits
        jax.ShapeDtypeStruct((B_pad, D_FEAT), jnp.bfloat16),      # adapted_img (normalized)
        jax.ShapeDtypeStruct((B_pad, D_FEAT), jnp.bfloat16),      # adapted_txt (normalized)
    )

    head, a_img, a_txt = pl.pallas_call(
        clip_head_kernel,
        out_shape=out_shapes,
        grid=grid,
        in_specs=in_specs,
        out_specs=out_specs,
        compiler_params=pltpu.CompilerParams(
            dimension_semantics=("parallel",),   # batch tiles shard across v7x's 2 TCs
            vmem_limit_bytes=vmem_limit,
        ),
    )(
        image_features, text_features,
        params["iw1"], params["ib1"], params["iw2"], params["ib2"],
        params["tw1"], params["tb1"], params["tw2"], params["tb2"],
        hw, hb,
    )

    color_logits = head[:B, :N_COLOR]
    object_logits = head[:B, N_COLOR:N_COLOR + N_OBJECT]
    # a_img / a_txt are returned in bf16 (cast back to f32 here if a downstream
    # consumer needs full precision).
    return color_logits, object_logits, a_img[:B], a_txt[:B]


def _reference(images, texts, params):
    """Pure-JAX f32 reference of the same forward (for a correctness check).

    Consumes the same bf16 feature hand-off as the kernel so the check
    validates the Pallas kernel itself.
    """
    img_bf, txt_bf = _encode_stub(images, texts, params)
    img = img_bf.astype(jnp.float32)
    txt = txt_bf.astype(jnp.float32)

    def adapter(x, w1, b1, w2, b2):
        h = x @ w1.astype(jnp.float32) + b1
        h = _exact_gelu(h)
        return h @ w2.astype(jnp.float32) + b2

    a_img = img + 0.05 * adapter(img, params["iw1"], params["ib1"],
                                 params["iw2"], params["ib2"])
    a_txt = txt + 0.05 * adapter(txt, params["tw1"], params["tb1"],
                                 params["tw2"], params["tb2"])
    a_img = a_img / jnp.linalg.norm(a_img, axis=-1, keepdims=True)
    a_txt = a_txt / jnp.linalg.norm(a_txt, axis=-1, keepdims=True)
    return (a_img @ params["cw"] + params["cb"],
            a_img @ params["ow"] + params["ob"],
            a_img, a_txt)


if __name__ == "__main__":
    key = jax.random.PRNGKey(0)
    k_param, k_img, k_txt = jax.random.split(key, 3)

    params = init_params(k_param)

    batch = 2
    images = jax.random.normal(k_img, (batch, 3, 16, 16), jnp.float32)  # NCHW
    texts = jax.random.randint(k_txt, (batch, 8), 0, 64)                # token ids

    outs = enhanced_clip_forward(images, texts, params)
    outs = jax.block_until_ready(outs)

    refs = _reference(images, texts, params)
    # bf16 MXU operands / bf16 feature & output hand-off (f32 accumulation)
    # -> loosened tolerance vs. the pure-f32 reference arithmetic.
    for o, r in zip(outs, refs):
        assert o.shape == r.shape, (o.shape, r.shape)
        err = jnp.max(jnp.abs(o.astype(jnp.float32) - r))
        assert err < 5e-3, err

    print("KERNEL_OK")
</pallas_src>

<mosaic_0001>
module attributes {stable_mosaic.version = 11 : i64} {
  func.func @clip_head_kernel(%arg0: i32, %arg1: memref<16x512xbf16, #tpu.memory_space<vmem>>, %arg2: memref<16x512xbf16, #tpu.memory_space<vmem>>, %arg3: memref<512x256xbf16, #tpu.memory_space<vmem>>, %arg4: memref<1x256xf32, #tpu.memory_space<vmem>>, %arg5: memref<256x512xbf16, #tpu.memory_space<vmem>>, %arg6: memref<1x512xf32, #tpu.memory_space<vmem>>, %arg7: memref<512x256xbf16, #tpu.memory_space<vmem>>, %arg8: memref<1x256xf32, #tpu.memory_space<vmem>>, %arg9: memref<256x512xbf16, #tpu.memory_space<vmem>>, %arg10: memref<1x512xf32, #tpu.memory_space<vmem>>, %arg11: memref<512x128xbf16, #tpu.memory_space<vmem>>, %arg12: memref<1x128xf32, #tpu.memory_space<vmem>>, %arg13: memref<16x128xf32, #tpu.memory_space<vmem>>, %arg14: memref<16x512xbf16, #tpu.memory_space<vmem>>, %arg15: memref<16x512xbf16, #tpu.memory_space<vmem>>) attributes {dimension_semantics = [#tpu.dimension_semantics<parallel>], iteration_bounds = array<i64: 1>, scalar_prefetch = 0 : i64, scratch_operands = 0 : i64, tpu.core_type = #tpu.core_type<tc>, window_params = [{transform_indices = @transform_0, window_bounds = array<i64: 16, 512>}, {transform_indices = @transform_1, window_bounds = array<i64: 16, 512>}, {pipeline_mode = #tpu.pipeline_mode<synchronous>, transform_indices = @transform_2, window_bounds = array<i64: 512, 256>}, {pipeline_mode = #tpu.pipeline_mode<synchronous>, transform_indices = @transform_3, window_bounds = array<i64: 1, 256>}, {pipeline_mode = #tpu.pipeline_mode<synchronous>, transform_indices = @transform_4, window_bounds = array<i64: 256, 512>}, {pipeline_mode = #tpu.pipeline_mode<synchronous>, transform_indices = @transform_5, window_bounds = array<i64: 1, 512>}, {pipeline_mode = #tpu.pipeline_mode<synchronous>, transform_indices = @transform_6, window_bounds = array<i64: 512, 256>}, {pipeline_mode = #tpu.pipeline_mode<synchronous>, transform_indices = @transform_7, window_bounds = array<i64: 1, 256>}, {pipeline_mode = #tpu.pipeline_mode<synchronous>, transform_indices = @transform_8, window_bounds = array<i64: 256, 512>}, {pipeline_mode = #tpu.pipeline_mode<synchronous>, transform_indices = @transform_9, window_bounds = array<i64: 1, 512>}, {pipeline_mode = #tpu.pipeline_mode<synchronous>, transform_indices = @transform_10, window_bounds = array<i64: 512, 128>}, {pipeline_mode = #tpu.pipeline_mode<synchronous>, transform_indices = @transform_11, window_bounds = array<i64: 1, 128>}, {transform_indices = @transform_12, window_bounds = array<i64: 16, 128>}, {transform_indices = @transform_13, window_bounds = array<i64: 16, 512>}, {transform_indices = @transform_14, window_bounds = array<i64: 16, 512>}]} {
    %c0 = arith.constant 0 : index
    %c0_0 = arith.constant 0 : index
    %0 = vector.load %arg1[%c0, %c0_0] : memref<16x512xbf16, #tpu.memory_space<vmem>>, vector<16x512xbf16>
    %c0_1 = arith.constant 0 : index
    %c0_2 = arith.constant 0 : index
    %1 = vector.load %arg2[%c0_1, %c0_2] : memref<16x512xbf16, #tpu.memory_space<vmem>>, vector<16x512xbf16>
    %2 = arith.extf %0 : vector<16x512xbf16> to vector<16x512xf32>
    %3 = arith.extf %1 : vector<16x512xbf16> to vector<16x512xf32>
    %c0_3 = arith.constant 0 : index
    %c0_4 = arith.constant 0 : index
    %4 = vector.load %arg3[%c0_3, %c0_4] : memref<512x256xbf16, #tpu.memory_space<vmem>>, vector<512x256xbf16>
    %cst = arith.constant dense<0.000000e+00> : vector<16x256xf32>
    %5 = tpu.matmul %0, %4, %cst {dimension_numbers = #tpu.dot_dimension_numbers<[1], [0], [0], [1], [0, 0, 1, 1], [], []>} : vector<16x512xbf16>, vector<512x256xbf16>, vector<16x256xf32> -> vector<16x256xf32>
    %c0_5 = arith.constant 0 : index
    %c0_6 = arith.constant 0 : index
    %6 = vector.load %arg4[%c0_5, %c0_6] : memref<1x256xf32, #tpu.memory_space<vmem>>, vector<1x256xf32>
    %7 = vector.broadcast %6 : vector<1x256xf32> to vector<16x256xf32>
    %8 = arith.addf %5, %7 : vector<16x256xf32>
    %cst_7 = arith.constant 5.000000e-01 : f32
    %9 = vector.broadcast %cst_7 : f32 to vector<16x256xf32>
    %10 = arith.mulf %9, %8 : vector<16x256xf32>
    %cst_8 = arith.constant 0.707106769 : f32
    %11 = vector.broadcast %cst_8 : f32 to vector<16x256xf32>
    %12 = arith.mulf %8, %11 : vector<16x256xf32>
    %13 = math.erf %12 : vector<16x256xf32>
    %cst_9 = arith.constant 1.000000e+00 : f32
    %14 = vector.broadcast %cst_9 : f32 to vector<16x256xf32>
    %15 = arith.addf %14, %13 : vector<16x256xf32>
    %16 = arith.mulf %10, %15 : vector<16x256xf32>
    %17 = arith.truncf %16 : vector<16x256xf32> to vector<16x256xbf16>
    %c0_10 = arith.constant 0 : index
    %c0_11 = arith.constant 0 : index
    %18 = vector.load %arg5[%c0_10, %c0_11] : memref<256x512xbf16, #tpu.memory_space<vmem>>, vector<256x512xbf16>
    %cst_12 = arith.constant dense<0.000000e+00> : vector<16x512xf32>
    %19 = tpu.matmul %17, %18, %cst_12 {dimension_numbers = #tpu.dot_dimension_numbers<[1], [0], [0], [1], [0, 0, 1, 1], [], []>} : vector<16x256xbf16>, vector<256x512xbf16>, vector<16x512xf32> -> vector<16x512xf32>
    %c0_13 = arith.constant 0 : index
    %c0_14 = arith.constant 0 : index
    %20 = vector.load %arg6[%c0_13, %c0_14] : memref<1x512xf32, #tpu.memory_space<vmem>>, vector<1x512xf32>
    %21 = vector.broadcast %20 : vector<1x512xf32> to vector<16x512xf32>
    %22 = arith.addf %19, %21 : vector<16x512xf32>
    %cst_15 = arith.constant 5.000000e-02 : f32
    %23 = vector.broadcast %cst_15 : f32 to vector<16x512xf32>
    %24 = arith.mulf %23, %22 : vector<16x512xf32>
    %25 = arith.addf %2, %24 : vector<16x512xf32>
    %c0_16 = arith.constant 0 : index
    %c0_17 = arith.constant 0 : index
    %26 = vector.load %arg7[%c0_16, %c0_17] : memref<512x256xbf16, #tpu.memory_space<vmem>>, vector<512x256xbf16>
    %cst_18 = arith.constant dense<0.000000e+00> : vector<16x256xf32>
    %27 = tpu.matmul %1, %26, %cst_18 {dimension_numbers = #tpu.dot_dimension_numbers<[1], [0], [0], [1], [0, 0, 1, 1], [], []>} : vector<16x512xbf16>, vector<512x256xbf16>, vector<16x256xf32> -> vector<16x256xf32>
    %c0_19 = arith.constant 0 : index
    %c0_20 = arith.constant 0 : index
    %28 = vector.load %arg8[%c0_19, %c0_20] : memref<1x256xf32, #tpu.memory_space<vmem>>, vector<1x256xf32>
    %29 = vector.broadcast %28 : vector<1x256xf32> to vector<16x256xf32>
    %30 = arith.addf %27, %29 : vector<16x256xf32>
    %cst_21 = arith.constant 5.000000e-01 : f32
    %31 = vector.broadcast %cst_21 : f32 to vector<16x256xf32>
    %32 = arith.mulf %31, %30 : vector<16x256xf32>
    %cst_22 = arith.constant 0.707106769 : f32
    %33 = vector.broadcast %cst_22 : f32 to vector<16x256xf32>
    %34 = arith.mulf %30, %33 : vector<16x256xf32>
    %35 = math.erf %34 : vector<16x256xf32>
    %cst_23 = arith.constant 1.000000e+00 : f32
    %36 = vector.broadcast %cst_23 : f32 to vector<16x256xf32>
    %37 = arith.addf %36, %35 : vector<16x256xf32>
    %38 = arith.mulf %32, %37 : vector<16x256xf32>
    %39 = arith.truncf %38 : vector<16x256xf32> to vector<16x256xbf16>
    %c0_24 = arith.constant 0 : index
    %c0_25 = arith.constant 0 : index
    %40 = vector.load %arg9[%c0_24, %c0_25] : memref<256x512xbf16, #tpu.memory_space<vmem>>, vector<256x512xbf16>
    %cst_26 = arith.constant dense<0.000000e+00> : vector<16x512xf32>
    %41 = tpu.matmul %39, %40, %cst_26 {dimension_numbers = #tpu.dot_dimension_numbers<[1], [0], [0], [1], [0, 0, 1, 1], [], []>} : vector<16x256xbf16>, vector<256x512xbf16>, vector<16x512xf32> -> vector<16x512xf32>
    %c0_27 = arith.constant 0 : index
    %c0_28 = arith.constant 0 : index
    %42 = vector.load %arg10[%c0_27, %c0_28] : memref<1x512xf32, #tpu.memory_space<vmem>>, vector<1x512xf32>
    %43 = vector.broadcast %42 : vector<1x512xf32> to vector<16x512xf32>
    %44 = arith.addf %41, %43 : vector<16x512xf32>
    %cst_29 = arith.constant 5.000000e-02 : f32
    %45 = vector.broadcast %cst_29 : f32 to vector<16x512xf32>
    %46 = arith.mulf %45, %44 : vector<16x512xf32>
    %47 = arith.addf %3, %46 : vector<16x512xf32>
    %48 = arith.mulf %25, %25 : vector<16x512xf32>
    %cst_30 = arith.constant dense<0.000000e+00> : vector<16xf32>
    %49 = vector.multi_reduction <add>, %48, %cst_30 [1] : vector<16x512xf32> to vector<16xf32>
    %50 = vector.shape_cast %49 : vector<16xf32> to vector<16x1xf32>
    %cst_31 = arith.constant 9.99999996E-13 : f32
    %51 = vector.broadcast %cst_31 : f32 to vector<16x1xf32>
    %52 = arith.addf %50, %51 : vector<16x1xf32>
    %53 = math.rsqrt %52 : vector<16x1xf32>
    %54 = vector.broadcast %53 : vector<16x1xf32> to vector<16x512xf32>
    %55 = arith.mulf %25, %54 : vector<16x512xf32>
    %56 = arith.mulf %47, %47 : vector<16x512xf32>
    %cst_32 = arith.constant dense<0.000000e+00> : vector<16xf32>
    %57 = vector.multi_reduction <add>, %56, %cst_32 [1] : vector<16x512xf32> to vector<16xf32>
    %58 = vector.shape_cast %57 : vector<16xf32> to vector<16x1xf32>
    %cst_33 = arith.constant 9.99999996E-13 : f32
    %59 = vector.broadcast %cst_33 : f32 to vector<16x1xf32>
    %60 = arith.addf %58, %59 : vector<16x1xf32>
    %61 = math.rsqrt %60 : vector<16x1xf32>
    %62 = vector.broadcast %61 : vector<16x1xf32> to vector<16x512xf32>
    %63 = arith.mulf %47, %62 : vector<16x512xf32>
    %64 = arith.truncf %55 : vector<16x512xf32> to vector<16x512xbf16>
    %c0_34 = arith.constant 0 : index
    %c0_35 = arith.constant 0 : index
    %65 = vector.load %arg11[%c0_34, %c0_35] : memref<512x128xbf16, #tpu.memory_space<vmem>>, vector<512x128xbf16>
    %cst_36 = arith.constant dense<0.000000e+00> : vector<16x128xf32>
    %66 = tpu.matmul %64, %65, %cst_36 {dimension_numbers = #tpu.dot_dimension_numbers<[1], [0], [0], [1], [0, 0, 1, 1], [], []>} : vector<16x512xbf16>, vector<512x128xbf16>, vector<16x128xf32> -> vector<16x128xf32>
    %c0_37 = arith.constant 0 : index
    %c0_38 = arith.constant 0 : index
    %67 = vector.load %arg12[%c0_37, %c0_38] : memref<1x128xf32, #tpu.memory_space<vmem>>, vector<1x128xf32>
    %68 = vector.broadcast %67 : vector<1x128xf32> to vector<16x128xf32>
    %69 = arith.addf %66, %68 : vector<16x128xf32>
    %c0_39 = arith.constant 0 : index
    %c0_40 = arith.constant 0 : index
    %70 = vector.load %arg13[%c0_39, %c0_40] : memref<16x128xf32, #tpu.memory_space<vmem>>, vector<16x128xf32>
    tpu.vector_store %arg13[%c0_39, %c0_40], %69 {strides = array<i32>} : memref<16x128xf32, #tpu.memory_space<vmem>>, vector<16x128xf32>,
    %71 = arith.truncf %55 : vector<16x512xf32> to vector<16x512xbf16>
    %c0_41 = arith.constant 0 : index
    %c0_42 = arith.constant 0 : index
    %72 = vector.load %arg14[%c0_41, %c0_42] : memref<16x512xbf16, #tpu.memory_space<vmem>>, vector<16x512xbf16>
    tpu.vector_store %arg14[%c0_41, %c0_42], %71 {strides = array<i32>} : memref<16x512xbf16, #tpu.memory_space<vmem>>, vector<16x512xbf16>,
    %73 = arith.truncf %63 : vector<16x512xf32> to vector<16x512xbf16>
    %c0_43 = arith.constant 0 : index
    %c0_44 = arith.constant 0 : index
    %74 = vector.load %arg15[%c0_43, %c0_44] : memref<16x512xbf16, #tpu.memory_space<vmem>>, vector<16x512xbf16>
    tpu.vector_store %arg15[%c0_43, %c0_44], %73 {strides = array<i32>} : memref<16x512xbf16, #tpu.memory_space<vmem>>, vector<16x512xbf16>,
    return
  }
  func.func @transform_0(%arg0: i32) -> (i32, i32) {
    %c0_i32 = arith.constant 0 : i32
    %c0_i32_0 = arith.constant 0 : i32
    return %arg0, %c0_i32 : i32, i32
  }
  func.func @transform_1(%arg0: i32) -> (i32, i32) {
    %c0_i32 = arith.constant 0 : i32
    %c0_i32_0 = arith.constant 0 : i32
    return %arg0, %c0_i32 : i32, i32
  }
  func.func @transform_2(%arg0: i32) -> (i32, i32) {
    %c0_i32 = arith.constant 0 : i32
    %c0_i32_0 = arith.constant 0 : i32
    %c0_i32_1 = arith.constant 0 : i32
    return %c0_i32, %c0_i32_0 : i32, i32
  }
  func.func @transform_3(%arg0: i32) -> (i32, i32) {
    %c0_i32 = arith.constant 0 : i32
    %c0_i32_0 = arith.constant 0 : i32
    %c0_i32_1 = arith.constant 0 : i32
    return %c0_i32, %c0_i32_0 : i32, i32
  }
  func.func @transform_4(%arg0: i32) -> (i32, i32) {
    %c0_i32 = arith.constant 0 : i32
    %c0_i32_0 = arith.constant 0 : i32
    %c0_i32_1 = arith.constant 0 : i32
    return %c0_i32, %c0_i32_0 : i32, i32
  }
  func.func @transform_5(%arg0: i32) -> (i32, i32) {
    %c0_i32 = arith.constant 0 : i32
    %c0_i32_0 = arith.constant 0 : i32
    %c0_i32_1 = arith.constant 0 : i32
    return %c0_i32, %c0_i32_0 : i32, i32
  }
  func.func @transform_6(%arg0: i32) -> (i32, i32) {
    %c0_i32 = arith.constant 0 : i32
    %c0_i32_0 = arith.constant 0 : i32
    %c0_i32_1 = arith.constant 0 : i32
    return %c0_i32, %c0_i32_0 : i32, i32
  }
  func.func @transform_7(%arg0: i32) -> (i32, i32) {
    %c0_i32 = arith.constant 0 : i32
    %c0_i32_0 = arith.constant 0 : i32
    %c0_i32_1 = arith.constant 0 : i32
    return %c0_i32, %c0_i32_0 : i32, i32
  }
  func.func @transform_8(%arg0: i32) -> (i32, i32) {
    %c0_i32 = arith.constant 0 : i32
    %c0_i32_0 = arith.constant 0 : i32
    %c0_i32_1 = arith.constant 0 : i32
    return %c0_i32, %c0_i32_0 : i32, i32
  }
  func.func @transform_9(%arg0: i32) -> (i32, i32) {
    %c0_i32 = arith.constant 0 : i32
    %c0_i32_0 = arith.constant 0 : i32
    %c0_i32_1 = arith.constant 0 : i32
    return %c0_i32, %c0_i32_0 : i32, i32
  }
  func.func @transform_10(%arg0: i32) -> (i32, i32) {
    %c0_i32 = arith.constant 0 : i32
    %c0_i32_0 = arith.constant 0 : i32
    %c0_i32_1 = arith.constant 0 : i32
    return %c0_i32, %c0_i32_0 : i32, i32
  }
  func.func @transform_11(%arg0: i32) -> (i32, i32) {
    %c0_i32 = arith.constant 0 : i32
    %c0_i32_0 = arith.constant 0 : i32
    %c0_i32_1 = arith.constant 0 : i32
    return %c0_i32, %c0_i32_0 : i32, i32
  }
  func.func @transform_12(%arg0: i32) -> (i32, i32) {
    %c0_i32 = arith.constant 0 : i32
    %c0_i32_0 = arith.constant 0 : i32
    return %arg0, %c0_i32 : i32, i32
  }
  func.func @transform_13(%arg0: i32) -> (i32, i32) {
    %c0_i32 = arith.constant 0 : i32
    %c0_i32_0 = arith.constant 0 : i32
    return %arg0, %c0_i32 : i32, i32
  }
  func.func @transform_14(%arg0: i32) -> (i32, i32) {
    %c0_i32 = arith.constant 0 : i32
    %c0_i32_0 = arith.constant 0 : i32
    return %arg0, %c0_i32 : i32, i32
  }
}

</mosaic_0001>

<llo_original>
// kernel: enhanced_clip_forward.1
$region0: #{enhanced_clip_forward.1}
  #allocation0 [shape = 'u32[]', space=smem, size = 0x4, offset = 0x4, fixed_abs, tag = 'smem constant byte address 0x4 - core index']
  #allocation1 [shape = 'u32[144,128]{1,0:T(1,128)}', space=vmem, size = 0x12000, scoped, tag = 'internal scratch']
  %s0 = inlined_call_operand.vmem [shape: bf16[16,512], index: 0, kind: input, shape index: {}]
  %s1 = inlined_call_operand.vmem [shape: bf16[16,512], index: 1, kind: input, shape index: {}]
  %s2 = inlined_call_operand.vmem [shape: bf16[512,256], index: 2, kind: input, shape index: {}]
  %s3 = inlined_call_operand.vmem [shape: f32[1,256], index: 3, kind: input, shape index: {}]
  %s4 = inlined_call_operand.vmem [shape: bf16[256,512], index: 4, kind: input, shape index: {}]
  %s5 = inlined_call_operand.vmem [shape: f32[1,512], index: 5, kind: input, shape index: {}]
  %s6 = inlined_call_operand.vmem [shape: bf16[512,256], index: 6, kind: input, shape index: {}]
  %s7 = inlined_call_operand.vmem [shape: f32[1,256], index: 7, kind: input, shape index: {}]
  %s8 = inlined_call_operand.vmem [shape: bf16[256,512], index: 8, kind: input, shape index: {}]
  %s9 = inlined_call_operand.vmem [shape: f32[1,512], index: 9, kind: input, shape index: {}]
  %s10 = inlined_call_operand.vmem [shape: bf16[512,128], index: 10, kind: input, shape index: {}]
  %s11 = inlined_call_operand.vmem [shape: f32[1,128], index: 11, kind: input, shape index: {}]
  %s12 = inlined_call_operand.vmem [shape: f32[16,128], index: 12, kind: output, shape index: {0}]
  %s13 = inlined_call_operand.vmem [shape: bf16[16,512], index: 13, kind: output, shape index: {1}]
  %s14 = inlined_call_operand.vmem [shape: bf16[16,512], index: 14, kind: output, shape index: {2}]
  %15 = xla_tuple %s12, %s13, %s14
  %s16 = sld [smem:[#allocation0]]
  $region74: #{enhanced_clip_forward.1} parent=0
    _
  %s18 = ssub.s32 1, %s16
  %s19 = scalar_select 0, %s18, %s16
  // Predicated region
  $region2: #{enhanced_clip_forward.1} parent=0 // pred_check
    _
  $region3: #{enhanced_clip_forward.1} parent=0 // pred_check_branch
    %21 = sbr.rel (0) target = $region5
  $region4: #{enhanced_clip_forward.1} parent=0 // pred_region
    _
  $region5: #{enhanced_clip_forward.1} parent=0 // pred_fallthru
    _
  // Predicated region
  $region6: #{enhanced_clip_forward.1} parent=0 // pred_check
    _
  $region7: #{enhanced_clip_forward.1} parent=0 // pred_check_branch
    %23 = sbr.rel (0) target = $region9
  $region8: #{enhanced_clip_forward.1} parent=0 // pred_region
    _
  $region9: #{enhanced_clip_forward.1} parent=0 // pred_fallthru
    _
  // Predicated region
  $region10: #{enhanced_clip_forward.1} parent=0 // pred_check
    _
  $region11: #{enhanced_clip_forward.1} parent=0 // pred_check_branch
    %25 = sbr.rel (0) target = $region13
  $region12: #{enhanced_clip_forward.1} parent=0 // pred_region
    _
  $region13: #{enhanced_clip_forward.1} parent=0 // pred_fallthru
    _
  // Predicated region
  $region14: #{enhanced_clip_forward.1} parent=0 // pred_check
    _
  $region15: #{enhanced_clip_forward.1} parent=0 // pred_check_branch
    %27 = sbr.rel (0) target = $region17
  $region16: #{enhanced_clip_forward.1} parent=0 // pred_region
    _
  $region17: #{enhanced_clip_forward.1} parent=0 // pred_fallthru
    _
  // Predicated region
  $region18: #{enhanced_clip_forward.1} parent=0 // pred_check
    _
  $region19: #{enhanced_clip_forward.1} parent=0 // pred_check_branch
    %29 = sbr.rel (0) target = $region21
  $region20: #{enhanced_clip_forward.1} parent=0 // pred_region
    _
  $region21: #{enhanced_clip_forward.1} parent=0 // pred_fallthru
    _
  // Predicated region
  $region22: #{enhanced_clip_forward.1} parent=0 // pred_check
    _
  $region23: #{enhanced_clip_forward.1} parent=0 // pred_check_branch
    %31 = sbr.rel (0) target = $region25
  $region24: #{enhanced_clip_forward.1} parent=0 // pred_region
    _
  $region25: #{enhanced_clip_forward.1} parent=0 // pred_fallthru
    _
  // Predicated region
  $region26: #{enhanced_clip_forward.1} parent=0 // pred_check
    _
  $region27: #{enhanced_clip_forward.1} parent=0 // pred_check_branch
    %33 = sbr.rel (0) target = $region29
  $region28: #{enhanced_clip_forward.1} parent=0 // pred_region
    _
  $region29: #{enhanced_clip_forward.1} parent=0 // pred_fallthru
    _
  // Predicated region
  $region30: #{enhanced_clip_forward.1} parent=0 // pred_check
    _
  $region31: #{enhanced_clip_forward.1} parent=0 // pred_check_branch
    %35 = sbr.rel (0) target = $region33
  $region32: #{enhanced_clip_forward.1} parent=0 // pred_region
    _
  $region33: #{enhanced_clip_forward.1} parent=0 // pred_fallthru
    _
  // Predicated region
  $region34: #{enhanced_clip_forward.1} parent=0 // pred_check
    _
  $region35: #{enhanced_clip_forward.1} parent=0 // pred_check_branch
    %37 = sbr.rel (0) target = $region37
  $region36: #{enhanced_clip_forward.1} parent=0 // pred_region
    _
  $region37: #{enhanced_clip_forward.1} parent=0 // pred_fallthru
    _
  // Predicated region
  $region38: #{enhanced_clip_forward.1} parent=0 // pred_check
    _
  $region39: #{enhanced_clip_forward.1} parent=0 // pred_check_branch
    %39 = sbr.rel (0) target = $region41
  $region40: #{enhanced_clip_forward.1} parent=0 // pred_region
    _
  $region41: #{enhanced_clip_forward.1} parent=0 // pred_fallthru
    _
  // Predicated region
  $region42: #{enhanced_clip_forward.1} parent=0 // pred_check
    _
  $region43: #{enhanced_clip_forward.1} parent=0 // pred_check_branch
    %41 = sbr.rel (0) target = $region45
  $region44: #{enhanced_clip_forward.1} parent=0 // pred_region
    _
  $region45: #{enhanced_clip_forward.1} parent=0 // pred_fallthru
    _
  // Predicated region
  $region46: #{enhanced_clip_forward.1} parent=0 // pred_check
    _
  $region47: #{enhanced_clip_forward.1} parent=0 // pred_check_branch
    %43 = sbr.rel (0) target = $region49
  $region48: #{enhanced_clip_forward.1} parent=0 // pred_region
    _
  $region49: #{enhanced_clip_forward.1} parent=0 // pred_fallthru
    _
  %v45 = vld [vmem:[%s0] sm:$0xff]
  %v46 = vld [vmem:[%s0 + $0x8] sm:$0xff]
  %v47 = vld [vmem:[%s0 + $0x10] sm:$0xff]
  %v48 = vld [vmem:[%s0 + $0x18] sm:$0xff]
  %v49 = vld [vmem:[%s1] sm:$0xff]
  %v50 = vld [vmem:[%s1 + $0x8] sm:$0xff]
  %v51 = vld [vmem:[%s1 + $0x10] sm:$0xff]
  %v52 = vld [vmem:[%s1 + $0x18] sm:$0xff]
  %v53 = vunpack.c.l.bf16 %v45
  %v54 = vunpack.c.h.bf16 %v45
  %v55 = vunpack.c.l.bf16 %v46
  %v56 = vunpack.c.h.bf16 %v46
  %v57 = vunpack.c.l.bf16 %v47
  %v58 = vunpack.c.h.bf16 %v47
  %v59 = vunpack.c.l.bf16 %v48
  %v60 = vunpack.c.h.bf16 %v48
  %v61 = vunpack.c.l.bf16 %v49
  %v62 = vunpack.c.h.bf16 %v49
  %v63 = vunpack.c.l.bf16 %v50
  %v64 = vunpack.c.h.bf16 %v50
  %v65 = vunpack.c.l.bf16 %v51
  %v66 = vunpack.c.h.bf16 %v51
  %v67 = vunpack.c.l.bf16 %v52
  %v68 = vunpack.c.h.bf16 %v52
  %v69 = vld [vmem:[%s2] sm:$0xff]
  %v70 = vld [vmem:[%s2 + $0x8] sm:$0xff]
  %v71 = vld [vmem:[%s2 + $0x10] sm:$0xff]
  %v72 = vld [vmem:[%s2 + $0x18] sm:$0xff]
  %v73 = vld [vmem:[%s2 + $0x20] sm:$0xff]
  %v74 = vld [vmem:[%s2 + $0x28] sm:$0xff]
  %v75 = vld [vmem:[%s2 + $0x30] sm:$0xff]
  %v76 = vld [vmem:[%s2 + $0x38] sm:$0xff]
  %v77 = vld [vmem:[%s2 + $0x40] sm:$0xff]
  %v78 = vld [vmem:[%s2 + $0x48] sm:$0xff]
  %v79 = vld [vmem:[%s2 + $0x50] sm:$0xff]
  %v80 = vld [vmem:[%s2 + $0x58] sm:$0xff]
  %v81 = vld [vmem:[%s2 + $0x60] sm:$0xff]
  %v82 = vld [vmem:[%s2 + $0x68] sm:$0xff]
  %v83 = vld [vmem:[%s2 + $0x70] sm:$0xff]
  %v84 = vld [vmem:[%s2 + $0x78] sm:$0xff]
  %v85 = vld [vmem:[%s2 + $0x80] sm:$0xff]
  %v86 = vld [vmem:[%s2 + $0x88] sm:$0xff]
  %v87 = vld [vmem:[%s2 + $0x90] sm:$0xff]
  %v88 = vld [vmem:[%s2 + $0x98] sm:$0xff]
  %v89 = vld [vmem:[%s2 + $0xa0] sm:$0xff]
  %v90 = vld [vmem:[%s2 + $0xa8] sm:$0xff]
  %v91 = vld [vmem:[%s2 + $0xb0] sm:$0xff]
  %v92 = vld [vmem:[%s2 + $0xb8] sm:$0xff]
  %v93 = vld [vmem:[%s2 + $0xc0] sm:$0xff]
  %v94 = vld [vmem:[%s2 + $0xc8] sm:$0xff]
  %v95 = vld [vmem:[%s2 + $0xd0] sm:$0xff]
  %v96 = vld [vmem:[%s2 + $0xd8] sm:$0xff]
  %v97 = vld [vmem:[%s2 + $0xe0] sm:$0xff]
  %v98 = vld [vmem:[%s2 + $0xe8] sm:$0xff]
  %v99 = vld [vmem:[%s2 + $0xf0] sm:$0xff]
  %v100 = vld [vmem:[%s2 + $0xf8] sm:$0xff]
  %v101 = vld [vmem:[%s2 + $0x100] sm:$0xff]
  %v102 = vld [vmem:[%s2 + $0x108] sm:$0xff]
  %v103 = vld [vmem:[%s2 + $0x110] sm:$0xff]
  %v104 = vld [vmem:[%s2 + $0x118] sm:$0xff]
  %v105 = vld [vmem:[%s2 + $0x120] sm:$0xff]
  %v106 = vld [vmem:[%s2 + $0x128] sm:$0xff]
  %v107 = vld [vmem:[%s2 + $0x130] sm:$0xff]
  %v108 = vld [vmem:[%s2 + $0x138] sm:$0xff]
  %v109 = vld [vmem:[%s2 + $0x140] sm:$0xff]
  %v110 = vld [vmem:[%s2 + $0x148] sm:$0xff]
  %v111 = vld [vmem:[%s2 + $0x150] sm:$0xff]
  %v112 = vld [vmem:[%s2 + $0x158] sm:$0xff]
  %v113 = vld [vmem:[%s2 + $0x160] sm:$0xff]
  %v114 = vld [vmem:[%s2 + $0x168] sm:$0xff]
  %v115 = vld [vmem:[%s2 + $0x170] sm:$0xff]
  %v116 = vld [vmem:[%s2 + $0x178] sm:$0xff]
  %v117 = vld [vmem:[%s2 + $0x180] sm:$0xff]
  %v118 = vld [vmem:[%s2 + $0x188] sm:$0xff]
  %v119 = vld [vmem:[%s2 + $0x190] sm:$0xff]
  %v120 = vld [vmem:[%s2 + $0x198] sm:$0xff]
  %v121 = vld [vmem:[%s2 + $0x1a0] sm:$0xff]
  %v122 = vld [vmem:[%s2 + $0x1a8] sm:$0xff]
  %v123 = vld [vmem:[%s2 + $0x1b0] sm:$0xff]
  %v124 = vld [vmem:[%s2 + $0x1b8] sm:$0xff]
  %v125 = vld [vmem:[%s2 + $0x1c0] sm:$0xff]
  %v126 = vld [vmem:[%s2 + $0x1c8] sm:$0xff]
  %v127 = vld [vmem:[%s2 + $0x1d0] sm:$0xff]
  %v128 = vld [vmem:[%s2 + $0x1d8] sm:$0xff]
  %v129 = vld [vmem:[%s2 + $0x1e0] sm:$0xff]
  %v130 = vld [vmem:[%s2 + $0x1e8] sm:$0xff]
  %v131 = vld [vmem:[%s2 + $0x1f0] sm:$0xff]
  %v132 = vld [vmem:[%s2 + $0x1f8] sm:$0xff]
  %v133 = vld [vmem:[%s3] sm:$0x3]
  %v135 = vlaneseq
  %v136 = vshrl.u32 %v135, 7
  %v137 = vsub.s32 0, %v136
  %v138 = vrot.slane %v133, %v137
  %v139 = vlaneseq
  %v140 = vshrl.u32 %v139, 7
  %v141 = vsub.s32 1, %v140
  %v142 = vrot.slane %v133, %v141
  %v149 = vunpack.c.l.b16 %v45
  %v150 = vunpack.c.h.b16 %v45
  %v151 = vunpack.c.l.b16 %v46
  %v152 = vunpack.c.h.b16 %v46
  %v153 = vunpack.c.l.b16 %v47
  %v154 = vunpack.c.h.b16 %v47
  %v155 = vunpack.c.l.b16 %v48
  %v156 = vunpack.c.h.b16 %v48
  %v157 = vpack.c.b16 %v153, %v149
  %v158 = vpack.c.b16 %v154, %v150
  %v159 = vpack.c.b16 %v155, %v151
  %v160 = vpack.c.b16 %v156, %v152
  %v229 = vunpack.c.l.b16 %v69
  %v230 = vunpack.c.h.b16 %v69
  %v231 = vunpack.c.l.b16 %v70
  %v232 = vunpack.c.h.b16 %v70
  %v233 = vunpack.c.l.b16 %v71
  %v234 = vunpack.c.h.b16 %v71
  %v235 = vunpack.c.l.b16 %v72
  %v236 = vunpack.c.h.b16 %v72
  %v237 = vunpack.c.l.b16 %v73
  %v238 = vunpack.c.h.b16 %v73
  %v239 = vunpack.c.l.b16 %v74
  %v240 = vunpack.c.h.b16 %v74
  %v241 = vunpack.c.l.b16 %v75
  %v242 = vunpack.c.h.b16 %v75
  %v243 = vunpack.c.l.b16 %v76
  %v244 = vunpack.c.h.b16 %v76
  %v245 = vunpack.c.l.b16 %v77
  %v246 = vunpack.c.h.b16 %v77
  %v247 = vunpack.c.l.b16 %v78
  %v248 = vunpack.c.h.b16 %v78
  %v249 = vunpack.c.l.b16 %v79
  %v250 = vunpack.c.h.b16 %v79
  %v251 = vunpack.c.l.b16 %v80
  %v252 = vunpack.c.h.b16 %v80
  %v253 = vunpack.c.l.b16 %v81
  %v254 = vunpack.c.h.b16 %v81
  %v255 = vunpack.c.l.b16 %v82
  %v256 = vunpack.c.h.b16 %v82
  %v257 = vunpack.c.l.b16 %v83
  %v258 = vunpack.c.h.b16 %v83
  %v259 = vunpack.c.l.b16 %v84
  %v260 = vunpack.c.h.b16 %v84
  %v261 = vunpack.c.l.b16 %v85
  %v262 = vunpack.c.h.b16 %v85
  %v263 = vunpack.c.l.b16 %v86
  %v264 = vunpack.c.h.b16 %v86
  %v265 = vunpack.c.l.b16 %v87
  %v266 = vunpack.c.h.b16 %v87
  %v267 = vunpack.c.l.b16 %v88
  %v268 = vunpack.c.h.b16 %v88
  %v269 = vunpack.c.l.b16 %v89
  %v270 = vunpack.c.h.b16 %v89
  %v271 = vunpack.c.l.b16 %v90
  %v272 = vunpack.c.h.b16 %v90
  %v273 = vunpack.c.l.b16 %v91
  %v274 = vunpack.c.h.b16 %v91
  %v275 = vunpack.c.l.b16 %v92
  %v276 = vunpack.c.h.b16 %v92
  %v277 = vunpack.c.l.b16 %v93
  %v278 = vunpack.c.h.b16 %v93
  %v279 = vunpack.c.l.b16 %v94
  %v280 = vunpack.c.h.b16 %v94
  %v281 = vunpack.c.l.b16 %v95
  %v282 = vunpack.c.h.b16 %v95
  %v283 = vunpack.c.l.b16 %v96
  %v284 = vunpack.c.h.b16 %v96
  %v285 = vunpack.c.l.b16 %v97
  %v286 = vunpack.c.h.b16 %v97
  %v287 = vunpack.c.l.b16 %v98
  %v288 = vunpack.c.h.b16 %v98
  %v289 = vunpack.c.l.b16 %v99
  %v290 = vunpack.c.h.b16 %v99
  %v291 = vunpack.c.l.b16 %v100
  %v292 = vunpack.c.h.b16 %v100
  %v293 = vunpack.c.l.b16 %v101
  %v294 = vunpack.c.h.b16 %v101
  %v295 = vunpack.c.l.b16 %v102
  %v296 = vunpack.c.h.b16 %v102
  %v297 = vunpack.c.l.b16 %v103
  %v298 = vunpack.c.h.b16 %v103
  %v299 = vunpack.c.l.b16 %v104
  %v300 = vunpack.c.h.b16 %v104
  %v301 = vunpack.c.l.b16 %v105
  %v302 = vunpack.c.h.b16 %v105
  %v303 = vunpack.c.l.b16 %v106
  %v304 = vunpack.c.h.b16 %v106
  %v305 = vunpack.c.l.b16 %v107
  %v306 = vunpack.c.h.b16 %v107
  %v307 = vunpack.c.l.b16 %v108
  %v308 = vunpack.c.h.b16 %v108
  %v309 = vunpack.c.l.b16 %v109
  %v310 = vunpack.c.h.b16 %v109
  %v311 = vunpack.c.l.b16 %v110
  %v312 = vunpack.c.h.b16 %v110
  %v313 = vunpack.c.l.b16 %v111
  %v314 = vunpack.c.h.b16 %v111
  %v315 = vunpack.c.l.b16 %v112
  %v316 = vunpack.c.h.b16 %v112
  %v317 = vunpack.c.l.b16 %v113
  %v318 = vunpack.c.h.b16 %v113
  %v319 = vunpack.c.l.b16 %v114
  %v320 = vunpack.c.h.b16 %v114
  %v321 = vunpack.c.l.b16 %v115
  %v322 = vunpack.c.h.b16 %v115
  %v323 = vunpack.c.l.b16 %v116
  %v324 = vunpack.c.h.b16 %v116
  %v325 = vunpack.c.l.b16 %v117
  %v326 = vunpack.c.h.b16 %v117
  %v327 = vunpack.c.l.b16 %v118
  %v328 = vunpack.c.h.b16 %v118
  %v329 = vunpack.c.l.b16 %v119
  %v330 = vunpack.c.h.b16 %v119
  %v331 = vunpack.c.l.b16 %v120
  %v332 = vunpack.c.h.b16 %v120
  %v333 = vunpack.c.l.b16 %v121
  %v334 = vunpack.c.h.b16 %v121
  %v335 = vunpack.c.l.b16 %v122
  %v336 = vunpack.c.h.b16 %v122
  %v337 = vunpack.c.l.b16 %v123
  %v338 = vunpack.c.h.b16 %v123
  %v339 = vunpack.c.l.b16 %v124
  %v340 = vunpack.c.h.b16 %v124
  %v341 = vunpack.c.l.b16 %v125
  %v342 = vunpack.c.h.b16 %v125
  %v343 = vunpack.c.l.b16 %v126
  %v344 = vunpack.c.h.b16 %v126
  %v345 = vunpack.c.l.b16 %v127
  %v346 = vunpack.c.h.b16 %v127
  %v347 = vunpack.c.l.b16 %v128
  %v348 = vunpack.c.h.b16 %v128
  %v349 = vunpack.c.l.b16 %v129
  %v350 = vunpack.c.h.b16 %v129
  %v351 = vunpack.c.l.b16 %v130
  %v352 = vunpack.c.h.b16 %v130
  %v353 = vunpack.c.l.b16 %v131
  %v354 = vunpack.c.h.b16 %v131
  %v355 = vunpack.c.l.b16 %v132
  %v356 = vunpack.c.h.b16 %v132
  %v357 = vpack.c.b16 %v231, %v229
  %v358 = vpack.c.b16 %v232, %v230
  %v359 = vpack.c.b16 %v235, %v233
  %v360 = vpack.c.b16 %v236, %v234
  %v361 = vpack.c.b16 %v239, %v237
  %v362 = vpack.c.b16 %v240, %v238
  %v363 = vpack.c.b16 %v243, %v241
  %v364 = vpack.c.b16 %v244, %v242
  %v365 = vpack.c.b16 %v247, %v245
  %v366 = vpack.c.b16 %v248, %v246
  %v367 = vpack.c.b16 %v251, %v249
  %v368 = vpack.c.b16 %v252, %v250
  %v369 = vpack.c.b16 %v255, %v253
  %v370 = vpack.c.b16 %v256, %v254
  %v371 = vpack.c.b16 %v259, %v257
  %v372 = vpack.c.b16 %v260, %v258
  %v373 = vpack.c.b16 %v263, %v261
  %v374 = vpack.c.b16 %v264, %v262
  %v375 = vpack.c.b16 %v267, %v265
  %v376 = vpack.c.b16 %v268, %v266
  %v377 = vpack.c.b16 %v271, %v269
  %v378 = vpack.c.b16 %v272, %v270
  %v379 = vpack.c.b16 %v275, %v273
  %v380 = vpack.c.b16 %v276, %v274
  %v381 = vpack.c.b16 %v279, %v277
  %v382 = vpack.c.b16 %v280, %v278
  %v383 = vpack.c.b16 %v283, %v281
  %v384 = vpack.c.b16 %v284, %v282
  %v385 = vpack.c.b16 %v287, %v285
  %v386 = vpack.c.b16 %v288, %v286
  %v387 = vpack.c.b16 %v291, %v289
  %v388 = vpack.c.b16 %v292, %v290
  %v389 = vpack.c.b16 %v295, %v293
  %v390 = vpack.c.b16 %v296, %v294
  %v391 = vpack.c.b16 %v299, %v297
  %v392 = vpack.c.b16 %v300, %v298
  %v393 = vpack.c.b16 %v303, %v301
  %v394 = vpack.c.b16 %v304, %v302
  %v395 = vpack.c.b16 %v307, %v305
  %v396 = vpack.c.b16 %v308, %v306
  %v397 = vpack.c.b16 %v311, %v309
  %v398 = vpack.c.b16 %v312, %v310
  %v399 = vpack.c.b16 %v315, %v313
  %v400 = vpack.c.b16 %v316, %v314
  %v401 = vpack.c.b16 %v319, %v317
  %v402 = vpack.c.b16 %v320, %v318
  %v403 = vpack.c.b16 %v323, %v321
  %v404 = vpack.c.b16 %v324, %v322
  %v405 = vpack.c.b16 %v327, %v325
  %v406 = vpack.c.b16 %v328, %v326
  %v407 = vpack.c.b16 %v331, %v329
  %v408 = vpack.c.b16 %v332, %v330
  %v409 = vpack.c.b16 %v335, %v333
  %v410 = vpack.c.b16 %v336, %v334
  %v411 = vpack.c.b16 %v339, %v337
  %v412 = vpack.c.b16 %v340, %v338
  %v413 = vpack.c.b16 %v343, %v341
  %v414 = vpack.c.b16 %v344, %v342
  %v415 = vpack.c.b16 %v347, %v345
  %v416 = vpack.c.b16 %v348, %v346
  %v417 = vpack.c.b16 %v351, %v349
  %v418 = vpack.c.b16 %v352, %v350
  %v419 = vpack.c.b16 %v355, %v353
  %v420 = vpack.c.b16 %v356, %v354
  %485 = vmatprep.subr.bf16.mxu0 %v358
  %486 = vmatpush1.bf16.msra.mxu0 %v357
  %487 = vmatprep.subr.bf16.mxu0 %v360
  %488 = vmatpush1.bf16.msra.mxu0 %v359
  %489 = vmatprep.subr.bf16.mxu0 %v362
  %490 = vmatpush1.bf16.msra.mxu0 %v361
  %491 = vmatprep.subr.bf16.mxu0 %v364
  %492 = vmatpush1.bf16.msra.mxu0 %v363
  %493 = vmatprep.subr.bf16.mxu0 %v366
  %494 = vmatpush1.bf16.msra.mxu0 %v365
  %495 = vmatprep.subr.bf16.mxu0 %v368
  %496 = vmatpush1.bf16.msra.mxu0 %v367
  %497 = vmatprep.subr.bf16.mxu0 %v370
  %498 = vmatpush1.bf16.msra.mxu0 %v369
  %499 = vmatprep.subr.bf16.mxu0 %v372
  %500 = vmatpush1.bf16.msra.mxu0 %v371
  %501 = vmatprep.subr.bf16.mxu0 %v374
  %502 = vmatpush1.bf16.msra.mxu0 %v373
  %503 = vmatprep.subr.bf16.mxu0 %v376
  %504 = vmatpush1.bf16.msra.mxu0 %v375
  %505 = vmatprep.subr.bf16.mxu0 %v378
  %506 = vmatpush1.bf16.msra.mxu0 %v377
  %507 = vmatprep.subr.bf16.mxu0 %v380
  %508 = vmatpush1.bf16.msra.mxu0 %v379
  %509 = vmatprep.subr.bf16.mxu0 %v382
  %510 = vmatpush1.bf16.msra.mxu0 %v381
  %511 = vmatprep.subr.bf16.mxu0 %v384
  %512 = vmatpush1.bf16.msra.mxu0 %v383
  %513 = vmatprep.subr.bf16.mxu0 %v386
  %514 = vmatpush1.bf16.msra.mxu0 %v385
  %515 = vmatprep.subr.bf16.mxu0 %v388
  %516 = vmatpush1.bf16.msra.mxu0 %v387
  %517 = vmatprep.mubr.bf16.mxu0 %v158
  %518 = vmatmul.mubr.bf16.gmra.mrb[0].mxu0 %v157
  %v519 = vpop.f32.mrb[0].mxu0
  %v520 = vadd.f32 %v138, %v519
  %v521 = vpop.f32.mrb[0].mxu0
  %v522 = vadd.f32 %v142, %v521
  %v523 = vpop.f32.mrb[0].mxu0
  %v524 = vadd.f32 %v138, %v523
  %v525 = vpop.f32.mrb[0].mxu0
  %v526 = vadd.f32 %v142, %v525
  %527 = vdwg.mxu0
  %528 = vmatprep.subr.bf16.mxu0 %v390
  %529 = vmatpush1.bf16.msra.mxu0 %v389
  %530 = vmatprep.subr.bf16.mxu0 %v392
  %531 = vmatpush1.bf16.msra.mxu0 %v391
  %532 = vmatprep.subr.bf16.mxu0 %v394
  %533 = vmatpush1.bf16.msra.mxu0 %v393
  %534 = vmatprep.subr.bf16.mxu0 %v396
  %535 = vmatpush1.bf16.msra.mxu0 %v395
  %536 = vmatprep.subr.bf16.mxu0 %v398
  %537 = vmatpush1.bf16.msra.mxu0 %v397
  %538 = vmatprep.subr.bf16.mxu0 %v400
  %539 = vmatpush1.bf16.msra.mxu0 %v399
  %540 = vmatprep.subr.bf16.mxu0 %v402
  %541 = vmatpush1.bf16.msra.mxu0 %v401
  %542 = vmatprep.subr.bf16.mxu0 %v404
  %543 = vmatpush1.bf16.msra.mxu0 %v403
  %544 = vmatprep.subr.bf16.mxu0 %v406
  %545 = vmatpush1.bf16.msra.mxu0 %v405
  %546 = vmatprep.subr.bf16.mxu0 %v408
  %547 = vmatpush1.bf16.msra.mxu0 %v407
  %548 = vmatprep.subr.bf16.mxu0 %v410
  %549 = vmatpush1.bf16.msra.mxu0 %v409
  %550 = vmatprep.subr.bf16.mxu0 %v412
  %551 = vmatpush1.bf16.msra.mxu0 %v411
  %552 = vmatprep.subr.bf16.mxu0 %v414
  %553 = vmatpush1.bf16.msra.mxu0 %v413
  %554 = vmatprep.subr.bf16.mxu0 %v416
  %555 = vmatpush1.bf16.msra.mxu0 %v415
  %556 = vmatprep.subr.bf16.mxu0 %v418
  %557 = vmatpush1.bf16.msra.mxu0 %v417
  %558 = vmatprep.subr.bf16.mxu0 %v420
  %559 = vmatpush1.bf16.msra.mxu0 %v419
  %560 = vmatprep.mubr.bf16.mxu0 %v160
  %561 = vmatmul.mubr.bf16.gmra.mrb[0].mxu0 %v159
  %v562 = vpop.f32.mrb[0].mxu0
  %v563 = vadd.f32 %v520, %v562
  %v564 = vpop.f32.mrb[0].mxu0
  %v565 = vadd.f32 %v522, %v564
  %v566 = vpop.f32.mrb[0].mxu0
  %v567 = vadd.f32 %v524, %v566
  %v568 = vpop.f32.mrb[0].mxu0
  %v569 = vadd.f32 %v526, %v568
  %570 = vdwg.mxu0
  %v571 = vmul.f32 %v563, 0.5
  %v572 = vmul.f32 %v565, 0.5
  %v573 = vmul.f32 %v567, 0.5
  %v574 = vmul.f32 %v569, 0.5
  %v575 = vmul.f32 %v563, 0.70710677
  %v576 = vmul.f32 %v565, 0.70710677
  %v577 = vmul.f32 %v567, 0.70710677
  %v578 = vmul.f32 %v569, 0.70710677
  %v579 = verf.f32.pop %v575
  %v580 = verf.f32.pop %v576
  %v581 = verf.f32.pop %v577
  %v582 = verf.f32.pop %v578
  %v583 = vadd.f32 %v579, 1.0
  %v584 = vadd.f32 %v580, 1.0
  %v585 = vadd.f32 %v581, 1.0
  %v586 = vadd.f32 %v582, 1.0
  %v587 = vmul.f32 %v571, %v583
  %v588 = vmul.f32 %v572, %v584
  %v589 = vmul.f32 %v573, %v585
  %v590 = vmul.f32 %v574, %v586
  %v591 = vpack.c.bf16 %v589, %v587
  %v592 = vpack.c.bf16 %v590, %v588
  %v593 = vld [vmem:[%s4] sm:$0xff]
  %v594 = vld [vmem:[%s4 + $0x8] sm:$0xff]
  %v595 = vld [vmem:[%s4 + $0x10] sm:$0xff]
  %v596 = vld [vmem:[%s4 + $0x18] sm:$0xff]
  %v597 = vld [vmem:[%s4 + $0x20] sm:$0xff]
  %v598 = vld [vmem:[%s4 + $0x28] sm:$0xff]
  %v599 = vld [vmem:[%s4 + $0x30] sm:$0xff]
  %v600 = vld [vmem:[%s4 + $0x38] sm:$0xff]
  %v601 = vld [vmem:[%s4 + $0x40] sm:$0xff]
  %v602 = vld [vmem:[%s4 + $0x48] sm:$0xff]
  %v603 = vld [vmem:[%s4 + $0x50] sm:$0xff]
  %v604 = vld [vmem:[%s4 + $0x58] sm:$0xff]
  %v605 = vld [vmem:[%s4 + $0x60] sm:$0xff]
  %v606 = vld [vmem:[%s4 + $0x68] sm:$0xff]
  %v607 = vld [vmem:[%s4 + $0x70] sm:$0xff]
  %v608 = vld [vmem:[%s4 + $0x78] sm:$0xff]
  %v609 = vld [vmem:[%s4 + $0x80] sm:$0xff]
  %v610 = vld [vmem:[%s4 + $0x88] sm:$0xff]
  %v611 = vld [vmem:[%s4 + $0x90] sm:$0xff]
  %v612 = vld [vmem:[%s4 + $0x98] sm:$0xff]
  %v613 = vld [vmem:[%s4 + $0xa0] sm:$0xff]
  %v614 = vld [vmem:[%s4 + $0xa8] sm:$0xff]
  %v615 = vld [vmem:[%s4 + $0xb0] sm:$0xff]
  %v616 = vld [vmem:[%s4 + $0xb8] sm:$0xff]
  %v617 = vld [vmem:[%s4 + $0xc0] sm:$0xff]
  %v618 = vld [vmem:[%s4 + $0xc8] sm:$0xff]
  %v619 = vld [vmem:[%s4 + $0xd0] sm:$0xff]
  %v620 = vld [vmem:[%s4 + $0xd8] sm:$0xff]
  %v621 = vld [vmem:[%s4 + $0xe0] sm:$0xff]
  %v622 = vld [vmem:[%s4 + $0xe8] sm:$0xff]
  %v623 = vld [vmem:[%s4 + $0xf0] sm:$0xff]
  %v624 = vld [vmem:[%s4 + $0xf8] sm:$0xff]
  %v625 = vld [vmem:[%s4 + $0x100] sm:$0xff]
  %v626 = vld [vmem:[%s4 + $0x108] sm:$0xff]
  %v627 = vld [vmem:[%s4 + $0x110] sm:$0xff]
  %v628 = vld [vmem:[%s4 + $0x118] sm:$0xff]
  %v629 = vld [vmem:[%s4 + $0x120] sm:$0xff]
  %v630 = vld [vmem:[%s4 + $0x128] sm:$0xff]
  %v631 = vld [vmem:[%s4 + $0x130] sm:$0xff]
  %v632 = vld [vmem:[%s4 + $0x138] sm:$0xff]
  %v633 = vld [vmem:[%s4 + $0x140] sm:$0xff]
  %v634 = vld [vmem:[%s4 + $0x148] sm:$0xff]
  %v635 = vld [vmem:[%s4 + $0x150] sm:$0xff]
  %v636 = vld [vmem:[%s4 + $0x158] sm:$0xff]
  %v637 = vld [vmem:[%s4 + $0x160] sm:$0xff]
  %v638 = vld [vmem:[%s4 + $0x168] sm:$0xff]
  %v639 = vld [vmem:[%s4 + $0x170] sm:$0xff]
  %v640 = vld [vmem:[%s4 + $0x178] sm:$0xff]
  %v641 = vld [vmem:[%s4 + $0x180] sm:$0xff]
  %v642 = vld [vmem:[%s4 + $0x188] sm:$0xff]
  %v643 = vld [vmem:[%s4 + $0x190] sm:$0xff]
  %v644 = vld [vmem:[%s4 + $0x198] sm:$0xff]
  %v645 = vld [vmem:[%s4 + $0x1a0] sm:$0xff]
  %v646 = vld [vmem:[%s4 + $0x1a8] sm:$0xff]
  %v647 = vld [vmem:[%s4 + $0x1b0] sm:$0xff]
  %v648 = vld [vmem:[%s4 + $0x1b8] sm:$0xff]
  %v649 = vld [vmem:[%s4 + $0x1c0] sm:$0xff]
  %v650 = vld [vmem:[%s4 + $0x1c8] sm:$0xff]
  %v651 = vld [vmem:[%s4 + $0x1d0] sm:$0xff]
  %v652 = vld [vmem:[%s4 + $0x1d8] sm:$0xff]
  %v653 = vld [vmem:[%s4 + $0x1e0] sm:$0xff]
  %v654 = vld [vmem:[%s4 + $0x1e8] sm:$0xff]
  %v655 = vld [vmem:[%s4 + $0x1f0] sm:$0xff]
  %v656 = vld [vmem:[%s4 + $0x1f8] sm:$0xff]
  %v657 = vld [vmem:[%s5] sm:$0xf]
  %v659 = vlaneseq
  %v660 = vshrl.u32 %v659, 7
  %v661 = vsub.s32 0, %v660
  %v662 = vrot.slane %v657, %v661
  %v663 = vlaneseq
  %v664 = vshrl.u32 %v663, 7
  %v665 = vsub.s32 1, %v664
  %v666 = vrot.slane %v657, %v665
  %v667 = vlaneseq
  %v668 = vshrl.u32 %v667, 7
  %v669 = vsub.s32 2, %v668
  %v670 = vrot.slane %v657, %v669
  %v671 = vlaneseq
  %v672 = vshrl.u32 %v671, 7
  %v673 = vsub.s32 3, %v672
  %v674 = vrot.slane %v657, %v673
  %v743 = vunpack.c.l.b16 %v593
  %v744 = vunpack.c.h.b16 %v593
  %v745 = vunpack.c.l.b16 %v594
  %v746 = vunpack.c.h.b16 %v594
  %v747 = vunpack.c.l.b16 %v595
  %v748 = vunpack.c.h.b16 %v595
  %v749 = vunpack.c.l.b16 %v596
  %v750 = vunpack.c.h.b16 %v596
  %v751 = vunpack.c.l.b16 %v597
  %v752 = vunpack.c.h.b16 %v597
  %v753 = vunpack.c.l.b16 %v598
  %v754 = vunpack.c.h.b16 %v598
  %v755 = vunpack.c.l.b16 %v599
  %v756 = vunpack.c.h.b16 %v599
  %v757 = vunpack.c.l.b16 %v600
  %v758 = vunpack.c.h.b16 %v600
  %v759 = vunpack.c.l.b16 %v601
  %v760 = vunpack.c.h.b16 %v601
  %v761 = vunpack.c.l.b16 %v602
  %v762 = vunpack.c.h.b16 %v602
  %v763 = vunpack.c.l.b16 %v603
  %v764 = vunpack.c.h.b16 %v603
  %v765 = vunpack.c.l.b16 %v604
  %v766 = vunpack.c.h.b16 %v604
  %v767 = vunpack.c.l.b16 %v605
  %v768 = vunpack.c.h.b16 %v605
  %v769 = vunpack.c.l.b16 %v606
  %v770 = vunpack.c.h.b16 %v606
  %v771 = vunpack.c.l.b16 %v607
  %v772 = vunpack.c.h.b16 %v607
  %v773 = vunpack.c.l.b16 %v608
  %v774 = vunpack.c.h.b16 %v608
  %v775 = vunpack.c.l.b16 %v609
  %v776 = vunpack.c.h.b16 %v609
  %v777 = vunpack.c.l.b16 %v610
  %v778 = vunpack.c.h.b16 %v610
  %v779 = vunpack.c.l.b16 %v611
  %v780 = vunpack.c.h.b16 %v611
  %v781 = vunpack.c.l.b16 %v612
  %v782 = vunpack.c.h.b16 %v612
  %v783 = vunpack.c.l.b16 %v613
  %v784 = vunpack.c.h.b16 %v613
  %v785 = vunpack.c.l.b16 %v614
  %v786 = vunpack.c.h.b16 %v614
  %v787 = vunpack.c.l.b16 %v615
  %v788 = vunpack.c.h.b16 %v615
  %v789 = vunpack.c.l.b16 %v616
  %v790 = vunpack.c.h.b16 %v616
  %v791 = vunpack.c.l.b16 %v617
  %v792 = vunpack.c.h.b16 %v617
  %v793 = vunpack.c.l.b16 %v618
  %v794 = vunpack.c.h.b16 %v618
  %v795 = vunpack.c.l.b16 %v619
  %v796 = vunpack.c.h.b16 %v619
  %v797 = vunpack.c.l.b16 %v620
  %v798 = vunpack.c.h.b16 %v620
  %v799 = vunpack.c.l.b16 %v621
  %v800 = vunpack.c.h.b16 %v621
  %v801 = vunpack.c.l.b16 %v622
  %v802 = vunpack.c.h.b16 %v622
  %v803 = vunpack.c.l.b16 %v623
  %v804 = vunpack.c.h.b16 %v623
  %v805 = vunpack.c.l.b16 %v624
  %v806 = vunpack.c.h.b16 %v624
  %v807 = vunpack.c.l.b16 %v625
  %v808 = vunpack.c.h.b16 %v625
  %v809 = vunpack.c.l.b16 %v626
  %v810 = vunpack.c.h.b16 %v626
  %v811 = vunpack.c.l.b16 %v627
  %v812 = vunpack.c.h.b16 %v627
  %v813 = vunpack.c.l.b16 %v628
  %v814 = vunpack.c.h.b16 %v628
  %v815 = vunpack.c.l.b16 %v629
  %v816 = vunpack.c.h.b16 %v629
  %v817 = vunpack.c.l.b16 %v630
  %v818 = vunpack.c.h.b16 %v630
  %v819 = vunpack.c.l.b16 %v631
  %v820 = vunpack.c.h.b16 %v631
  %v821 = vunpack.c.l.b16 %v632
  %v822 = vunpack.c.h.b16 %v632
  %v823 = vunpack.c.l.b16 %v633
  %v824 = vunpack.c.h.b16 %v633
  %v825 = vunpack.c.l.b16 %v634
  %v826 = vunpack.c.h.b16 %v634
  %v827 = vunpack.c.l.b16 %v635
  %v828 = vunpack.c.h.b16 %v635
  %v829 = vunpack.c.l.b16 %v636
  %v830 = vunpack.c.h.b16 %v636
  %v831 = vunpack.c.l.b16 %v637
  %v832 = vunpack.c.h.b16 %v637
  %v833 = vunpack.c.l.b16 %v638
  %v834 = vunpack.c.h.b16 %v638
  %v835 = vunpack.c.l.b16 %v639
  %v836 = vunpack.c.h.b16 %v639
  %v837 = vunpack.c.l.b16 %v640
  %v838 = vunpack.c.h.b16 %v640
  %v839 = vunpack.c.l.b16 %v641
  %v840 = vunpack.c.h.b16 %v641
  %v841 = vunpack.c.l.b16 %v642
  %v842 = vunpack.c.h.b16 %v642
  %v843 = vunpack.c.l.b16 %v643
  %v844 = vunpack.c.h.b16 %v643
  %v845 = vunpack.c.l.b16 %v644
  %v846 = vunpack.c.h.b16 %v644
  %v847 = vunpack.c.l.b16 %v645
  %v848 = vunpack.c.h.b16 %v645
  %v849 = vunpack.c.l.b16 %v646
  %v850 = vunpack.c.h.b16 %v646
  %v851 = vunpack.c.l.b16 %v647
  %v852 = vunpack.c.h.b16 %v647
  %v853 = vunpack.c.l.b16 %v648
  %v854 = vunpack.c.h.b16 %v648
  %v855 = vunpack.c.l.b16 %v649
  %v856 = vunpack.c.h.b16 %v649
  %v857 = vunpack.c.l.b16 %v650
  %v858 = vunpack.c.h.b16 %v650
  %v859 = vunpack.c.l.b16 %v651
  %v860 = vunpack.c.h.b16 %v651
  %v861 = vunpack.c.l.b16 %v652
  %v862 = vunpack.c.h.b16 %v652
  %v863 = vunpack.c.l.b16 %v653
  %v864 = vunpack.c.h.b16 %v653
  %v865 = vunpack.c.l.b16 %v654
  %v866 = vunpack.c.h.b16 %v654
  %v867 = vunpack.c.l.b16 %v655
  %v868 = vunpack.c.h.b16 %v655
  %v869 = vunpack.c.l.b16 %v656
  %v870 = vunpack.c.h.b16 %v656
  %v871 = vpack.c.b16 %v747, %v743
  %v872 = vpack.c.b16 %v748, %v744
  %v873 = vpack.c.b16 %v749, %v745
  %v874 = vpack.c.b16 %v750, %v746
  %v875 = vpack.c.b16 %v755, %v751
  %v876 = vpack.c.b16 %v756, %v752
  %v877 = vpack.c.b16 %v757, %v753
  %v878 = vpack.c.b16 %v758, %v754
  %v879 = vpack.c.b16 %v763, %v759
  %v880 = vpack.c.b16 %v764, %v760
  %v881 = vpack.c.b16 %v765, %v761
  %v882 = vpack.c.b16 %v766, %v762
  %v883 = vpack.c.b16 %v771, %v767
  %v884 = vpack.c.b16 %v772, %v768
  %v885 = vpack.c.b16 %v773, %v769
  %v886 = vpack.c.b16 %v774, %v770
  %v887 = vpack.c.b16 %v779, %v775
  %v888 = vpack.c.b16 %v780, %v776
  %v889 = vpack.c.b16 %v781, %v777
  %v890 = vpack.c.b16 %v782, %v778
  %v891 = vpack.c.b16 %v787, %v783
  %v892 = vpack.c.b16 %v788, %v784
  %v893 = vpack.c.b16 %v789, %v785
  %v894 = vpack.c.b16 %v790, %v786
  %v895 = vpack.c.b16 %v795, %v791
  %v896 = vpack.c.b16 %v796, %v792
  %v897 = vpack.c.b16 %v797, %v793
  %v898 = vpack.c.b16 %v798, %v794
  %v899 = vpack.c.b16 %v803, %v799
  %v900 = vpack.c.b16 %v804, %v800
  %v901 = vpack.c.b16 %v805, %v801
  %v902 = vpack.c.b16 %v806, %v802
  %v903 = vpack.c.b16 %v811, %v807
  %v904 = vpack.c.b16 %v812, %v808
  %v905 = vpack.c.b16 %v813, %v809
  %v906 = vpack.c.b16 %v814, %v810
  %v907 = vpack.c.b16 %v819, %v815
  %v908 = vpack.c.b16 %v820, %v816
  %v909 = vpack.c.b16 %v821, %v817
  %v910 = vpack.c.b16 %v822, %v818
  %v911 = vpack.c.b16 %v827, %v823
  %v912 = vpack.c.b16 %v828, %v824
  %v913 = vpack.c.b16 %v829, %v825
  %v914 = vpack.c.b16 %v830, %v826
  %v915 = vpack.c.b16 %v835, %v831
  %v916 = vpack.c.b16 %v836, %v832
  %v917 = vpack.c.b16 %v837, %v833
  %v918 = vpack.c.b16 %v838, %v834
  %v919 = vpack.c.b16 %v843, %v839
  %v920 = vpack.c.b16 %v844, %v840
  %v921 = vpack.c.b16 %v845, %v841
  %v922 = vpack.c.b16 %v846, %v842
  %v923 = vpack.c.b16 %v851, %v847
  %v924 = vpack.c.b16 %v852, %v848
  %v925 = vpack.c.b16 %v853, %v849
  %v926 = vpack.c.b16 %v854, %v850
  %v927 = vpack.c.b16 %v859, %v855
  %v928 = vpack.c.b16 %v860, %v856
  %v929 = vpack.c.b16 %v861, %v857
  %v930 = vpack.c.b16 %v862, %v858
  %v931 = vpack.c.b16 %v867, %v863
  %v932 = vpack.c.b16 %v868, %v864
  %v933 = vpack.c.b16 %v869, %v865
  %v934 = vpack.c.b16 %v870, %v866
  %999 = vmatprep.subr.bf16.mxu0 %v872
  %1000 = vmatpush1.bf16.msra.mxu0 %v871
  %1001 = vmatprep.subr.bf16.mxu0 %v876
  %1002 = vmatpush1.bf16.msra.mxu0 %v875
  %1003 = vmatprep.subr.bf16.mxu0 %v880
  %1004 = vmatpush1.bf16.msra.mxu0 %v879
  %1005 = vmatprep.subr.bf16.mxu0 %v884
  %1006 = vmatpush1.bf16.msra.mxu0 %v883
  %1007 = vmatprep.subr.bf16.mxu0 %v888
  %1008 = vmatpush1.bf16.msra.mxu0 %v887
  %1009 = vmatprep.subr.bf16.mxu0 %v892
  %1010 = vmatpush1.bf16.msra.mxu0 %v891
  %1011 = vmatprep.subr.bf16.mxu0 %v896
  %1012 = vmatpush1.bf16.msra.mxu0 %v895
  %1013 = vmatprep.subr.bf16.mxu0 %v900
  %1014 = vmatpush1.bf16.msra.mxu0 %v899
  %1015 = vmatprep.subr.bf16.mxu0 %v904
  %1016 = vmatpush1.bf16.msra.mxu0 %v903
  %1017 = vmatprep.subr.bf16.mxu0 %v908
  %1018 = vmatpush1.bf16.msra.mxu0 %v907
  %1019 = vmatprep.subr.bf16.mxu0 %v912
  %1020 = vmatpush1.bf16.msra.mxu0 %v911
  %1021 = vmatprep.subr.bf16.mxu0 %v916
  %1022 = vmatpush1.bf16.msra.mxu0 %v915
  %1023 = vmatprep.subr.bf16.mxu0 %v920
  %1024 = vmatpush1.bf16.msra.mxu0 %v919
  %1025 = vmatprep.subr.bf16.mxu0 %v924
  %1026 = vmatpush1.bf16.msra.mxu0 %v923
  %1027 = vmatprep.subr.bf16.mxu0 %v928
  %1028 = vmatpush1.bf16.msra.mxu0 %v927
  %1029 = vmatprep.subr.bf16.mxu0 %v932
  %1030 = vmatpush1.bf16.msra.mxu0 %v931
  %1031 = vmatprep.mubr.bf16.mxu0 %v592
  %1032 = vmatmul.mubr.bf16.gmra.mrb[0].mxu0 %v591
  %v1033 = vpop.f32.mrb[0].mxu0
  %v1034 = vadd.f32 %v662, %v1033
  %v1035 = vpop.f32.mrb[0].mxu0
  %v1036 = vadd.f32 %v666, %v1035
  %v1037 = vpop.f32.mrb[0].mxu0
  %v1038 = vadd.f32 %v662, %v1037
  %v1039 = vpop.f32.mrb[0].mxu0
  %v1040 = vadd.f32 %v666, %v1039
  %1041 = vdwg.mxu0
  %1042 = vmatprep.subr.bf16.mxu0 %v874
  %1043 = vmatpush1.bf16.msra.mxu0 %v873
  %1044 = vmatprep.subr.bf16.mxu0 %v878
  %1045 = vmatpush1.bf16.msra.mxu0 %v877
  %1046 = vmatprep.subr.bf16.mxu0 %v882
  %1047 = vmatpush1.bf16.msra.mxu0 %v881
  %1048 = vmatprep.subr.bf16.mxu0 %v886
  %1049 = vmatpush1.bf16.msra.mxu0 %v885
  %1050 = vmatprep.subr.bf16.mxu0 %v890
  %1051 = vmatpush1.bf16.msra.mxu0 %v889
  %1052 = vmatprep.subr.bf16.mxu0 %v894
  %1053 = vmatpush1.bf16.msra.mxu0 %v893
  %1054 = vmatprep.subr.bf16.mxu0 %v898
  %1055 = vmatpush1.bf16.msra.mxu0 %v897
  %1056 = vmatprep.subr.bf16.mxu0 %v902
  %1057 = vmatpush1.bf16.msra.mxu0 %v901
  %1058 = vmatprep.subr.bf16.mxu0 %v906
  %1059 = vmatpush1.bf16.msra.mxu0 %v905
  %1060 = vmatprep.subr.bf16.mxu0 %v910
  %1061 = vmatpush1.bf16.msra.mxu0 %v909
  %1062 = vmatprep.subr.bf16.mxu0 %v914
  %1063 = vmatpush1.bf16.msra.mxu0 %v913
  %1064 = vmatprep.subr.bf16.mxu0 %v918
  %1065 = vmatpush1.bf16.msra.mxu0 %v917
  %1066 = vmatprep.subr.bf16.mxu0 %v922
  %1067 = vmatpush1.bf16.msra.mxu0 %v921
  %1068 = vmatprep.subr.bf16.mxu0 %v926
  %1069 = vmatpush1.bf16.msra.mxu0 %v925
  %1070 = vmatprep.subr.bf16.mxu0 %v930
  %1071 = vmatpush1.bf16.msra.mxu0 %v929
  %1072 = vmatprep.subr.bf16.mxu0 %v934
  %1073 = vmatpush1.bf16.msra.mxu0 %v933
  %1074 = vmatprep.mubr.bf16.mxu0 %v592
  %1075 = vmatmul.mubr.bf16.gmra.mrb[0].mxu0 %v591
  %v1076 = vpop.f32.mrb[0].mxu0
  %v1077 = vadd.f32 %v670, %v1076
  %v1078 = vpop.f32.mrb[0].mxu0
  %v1079 = vadd.f32 %v674, %v1078
  %v1080 = vpop.f32.mrb[0].mxu0
  %v1081 = vadd.f32 %v670, %v1080
  %v1082 = vpop.f32.mrb[0].mxu0
  %v1083 = vadd.f32 %v674, %v1082
  %1084 = vdwg.mxu0
  %v1085 = vmul.f32 %v1034, 0.05
  %v1086 = vmul.f32 %v1036, 0.05
  %v1087 = vmul.f32 %v1077, 0.05
  %v1088 = vmul.f32 %v1079, 0.05
  %v1089 = vmul.f32 %v1038, 0.05
  %v1090 = vmul.f32 %v1040, 0.05
  %v1091 = vmul.f32 %v1081, 0.05
  %v1092 = vmul.f32 %v1083, 0.05
  %v1093 = vadd.f32 %v53, %v1085
  %v1094 = vadd.f32 %v54, %v1086
  %v1095 = vadd.f32 %v55, %v1087
  %v1096 = vadd.f32 %v56, %v1088
  %v1097 = vadd.f32 %v57, %v1089
  %v1098 = vadd.f32 %v58, %v1090
  %v1099 = vadd.f32 %v59, %v1091
  %v1100 = vadd.f32 %v60, %v1092
  %v1101 = vld [vmem:[%s6] sm:$0xff]
  %v1102 = vld [vmem:[%s6 + $0x8] sm:$0xff]
  %v1103 = vld [vmem:[%s6 + $0x10] sm:$0xff]
  %v1104 = vld [vmem:[%s6 + $0x18] sm:$0xff]
  %v1105 = vld [vmem:[%s6 + $0x20] sm:$0xff]
  %v1106 = vld [vmem:[%s6 + $0x28] sm:$0xff]
  %v1107 = vld [vmem:[%s6 + $0x30] sm:$0xff]
  %v1108 = vld [vmem:[%s6 + $0x38] sm:$0xff]
  %v1109 = vld [vmem:[%s6 + $0x40] sm:$0xff]
  %v1110 = vld [vmem:[%s6 + $0x48] sm:$0xff]
  %v1111 = vld [vmem:[%s6 + $0x50] sm:$0xff]
  %v1112 = vld [vmem:[%s6 + $0x58] sm:$0xff]
  %v1113 = vld [vmem:[%s6 + $0x60] sm:$0xff]
  %v1114 = vld [vmem:[%s6 + $0x68] sm:$0xff]
  %v1115 = vld [vmem:[%s6 + $0x70] sm:$0xff]
  %v1116 = vld [vmem:[%s6 + $0x78] sm:$0xff]
  %v1117 = vld [vmem:[%s6 + $0x80] sm:$0xff]
  %v1118 = vld [vmem:[%s6 + $0x88] sm:$0xff]
  %v1119 = vld [vmem:[%s6 + $0x90] sm:$0xff]
  %v1120 = vld [vmem:[%s6 + $0x98] sm:$0xff]
  %v1121 = vld [vmem:[%s6 + $0xa0] sm:$0xff]
  %v1122 = vld [vmem:[%s6 + $0xa8] sm:$0xff]
  %v1123 = vld [vmem:[%s6 + $0xb0] sm:$0xff]
  %v1124 = vld [vmem:[%s6 + $0xb8] sm:$0xff]
  %v1125 = vld [vmem:[%s6 + $0xc0] sm:$0xff]
  %v1126 = vld [vmem:[%s6 + $0xc8] sm:$0xff]
  %v1127 = vld [vmem:[%s6 + $0xd0] sm:$0xff]
  %v1128 = vld [vmem:[%s6 + $0xd8] sm:$0xff]
  %v1129 = vld [vmem:[%s6 + $0xe0] sm:$0xff]
  %v1130 = vld [vmem:[%s6 + $0xe8] sm:$0xff]
  %v1131 = vld [vmem:[%s6 + $0xf0] sm:$0xff]
  %v1132 = vld [vmem:[%s6 + $0xf8] sm:$0xff]
  %v1133 = vld [vmem:[%s6 + $0x100] sm:$0xff]
  %v1134 = vld [vmem:[%s6 + $0x108] sm:$0xff]
  %v1135 = vld [vmem:[%s6 + $0x110] sm:$0xff]
  %v1136 = vld [vmem:[%s6 + $0x118] sm:$0xff]
  %v1137 = vld [vmem:[%s6 + $0x120] sm:$0xff]
  %v1138 = vld [vmem:[%s6 + $0x128] sm:$0xff]
  %v1139 = vld [vmem:[%s6 + $0x130] sm:$0xff]
  %v1140 = vld [vmem:[%s6 + $0x138] sm:$0xff]
  %v1141 = vld [vmem:[%s6 + $0x140] sm:$0xff]
  %v1142 = vld [vmem:[%s6 + $0x148] sm:$0xff]
  %v1143 = vld [vmem:[%s6 + $0x150] sm:$0xff]
  %v1144 = vld [vmem:[%s6 + $0x158] sm:$0xff]
  %v1145 = vld [vmem:[%s6 + $0x160] sm:$0xff]
  %v1146 = vld [vmem:[%s6 + $0x168] sm:$0xff]
  %v1147 = vld [vmem:[%s6 + $0x170] sm:$0xff]
  %v1148 = vld [vmem:[%s6 + $0x178] sm:$0xff]
  %v1149 = vld [vmem:[%s6 + $0x180] sm:$0xff]
  %v1150 = vld [vmem:[%s6 + $0x188] sm:$0xff]
  %v1151 = vld [vmem:[%s6 + $0x190] sm:$0xff]
  %v1152 = vld [vmem:[%s6 + $0x198] sm:$0xff]
  %v1153 = vld [vmem:[%s6 + $0x1a0] sm:$0xff]
  %v1154 = vld [vmem:[%s6 + $0x1a8] sm:$0xff]
  %v1155 = vld [vmem:[%s6 + $0x1b0] sm:$0xff]
  %v1156 = vld [vmem:[%s6 + $0x1b8] sm:$0xff]
  %v1157 = vld [vmem:[%s6 + $0x1c0] sm:$0xff]
  %v1158 = vld [vmem:[%s6 + $0x1c8] sm:$0xff]
  %v1159 = vld [vmem:[%s6 + $0x1d0] sm:$0xff]
  %v1160 = vld [vmem:[%s6 + $0x1d8] sm:$0xff]
  %v1161 = vld [vmem:[%s6 + $0x1e0] sm:$0xff]
  %v1162 = vld [vmem:[%s6 + $0x1e8] sm:$0xff]
  %v1163 = vld [vmem:[%s6 + $0x1f0] sm:$0xff]
  %v1164 = vld [vmem:[%s6 + $0x1f8] sm:$0xff]
  %v1165 = vld [vmem:[%s7] sm:$0x3]
  %v1167 = vlaneseq
  %v1168 = vshrl.u32 %v1167, 7
  %v1169 = vsub.s32 0, %v1168
  %v1170 = vrot.slane %v1165, %v1169
  %v1171 = vlaneseq
  %v1172 = vshrl.u32 %v1171, 7
  %v1173 = vsub.s32 1, %v1172
  %v1174 = vrot.slane %v1165, %v1173
  %v1181 = vunpack.c.l.b16 %v49
  %v1182 = vunpack.c.h.b16 %v49
  %v1183 = vunpack.c.l.b16 %v50
  %v1184 = vunpack.c.h.b16 %v50
  %v1185 = vunpack.c.l.b16 %v51
  %v1186 = vunpack.c.h.b16 %v51
  %v1187 = vunpack.c.l.b16 %v52
  %v1188 = vunpack.c.h.b16 %v52
  %v1189 = vpack.c.b16 %v1185, %v1181
  %v1190 = vpack.c.b16 %v1186, %v1182
  %v1191 = vpack.c.b16 %v1187, %v1183
  %v1192 = vpack.c.b16 %v1188, %v1184
  %v1261 = vunpack.c.l.b16 %v1101
  %v1262 = vunpack.c.h.b16 %v1101
  %v1263 = vunpack.c.l.b16 %v1102
  %v1264 = vunpack.c.h.b16 %v1102
  %v1265 = vunpack.c.l.b16 %v1103
  %v1266 = vunpack.c.h.b16 %v1103
  %v1267 = vunpack.c.l.b16 %v1104
  %v1268 = vunpack.c.h.b16 %v1104
  %v1269 = vunpack.c.l.b16 %v1105
  %v1270 = vunpack.c.h.b16 %v1105
  %v1271 = vunpack.c.l.b16 %v1106
  %v1272 = vunpack.c.h.b16 %v1106
  %v1273 = vunpack.c.l.b16 %v1107
  %v1274 = vunpack.c.h.b16 %v1107
  %v1275 = vunpack.c.l.b16 %v1108
  %v1276 = vunpack.c.h.b16 %v1108
  %v1277 = vunpack.c.l.b16 %v1109
  %v1278 = vunpack.c.h.b16 %v1109
  %v1279 = vunpack.c.l.b16 %v1110
  %v1280 = vunpack.c.h.b16 %v1110
  %v1281 = vunpack.c.l.b16 %v1111
  %v1282 = vunpack.c.h.b16 %v1111
  %v1283 = vunpack.c.l.b16 %v1112
  %v1284 = vunpack.c.h.b16 %v1112
  %v1285 = vunpack.c.l.b16 %v1113
  %v1286 = vunpack.c.h.b16 %v1113
  %v1287 = vunpack.c.l.b16 %v1114
  %v1288 = vunpack.c.h.b16 %v1114
  %v1289 = vunpack.c.l.b16 %v1115
  %v1290 = vunpack.c.h.b16 %v1115
  %v1291 = vunpack.c.l.b16 %v1116
  %v1292 = vunpack.c.h.b16 %v1116
  %v1293 = vunpack.c.l.b16 %v1117
  %v1294 = vunpack.c.h.b16 %v1117
  %v1295 = vunpack.c.l.b16 %v1118
  %v1296 = vunpack.c.h.b16 %v1118
  %v1297 = vunpack.c.l.b16 %v1119
  %v1298 = vunpack.c.h.b16 %v1119
  %v1299 = vunpack.c.l.b16 %v1120
  %v1300 = vunpack.c.h.b16 %v1120
  %v1301 = vunpack.c.l.b16 %v1121
  %v1302 = vunpack.c.h.b16 %v1121
  %v1303 = vunpack.c.l.b16 %v1122
  %v1304 = vunpack.c.h.b16 %v1122
  %v1305 = vunpack.c.l.b16 %v1123
  %v1306 = vunpack.c.h.b16 %v1123
  %v1307 = vunpack.c.l.b16 %v1124
  %v1308 = vunpack.c.h.b16 %v1124
  %v1309 = vunpack.c.l.b16 %v1125
  %v1310 = vunpack.c.h.b16 %v1125
  %v1311 = vunpack.c.l.b16 %v1126
  %v1312 = vunpack.c.h.b16 %v1126
  %v1313 = vunpack.c.l.b16 %v1127
  %v1314 = vunpack.c.h.b16 %v1127
  %v1315 = vunpack.c.l.b16 %v1128
  %v1316 = vunpack.c.h.b16 %v1128
  %v1317 = vunpack.c.l.b16 %v1129
  %v1318 = vunpack.c.h.b16 %v1129
  %v1319 = vunpack.c.l.b16 %v1130
  %v1320 = vunpack.c.h.b16 %v1130
  %v1321 = vunpack.c.l.b16 %v1131
  %v1322 = vunpack.c.h.b16 %v1131
  %v1323 = vunpack.c.l.b16 %v1132
  %v1324 = vunpack.c.h.b16 %v1132
  %v1325 = vunpack.c.l.b16 %v1133
  %v1326 = vunpack.c.h.b16 %v1133
  %v1327 = vunpack.c.l.b16 %v1134
  %v1328 = vunpack.c.h.b16 %v1134
  %v1329 = vunpack.c.l.b16 %v1135
  %v1330 = vunpack.c.h.b16 %v1135
  %v1331 = vunpack.c.l.b16 %v1136
  %v1332 = vunpack.c.h.b16 %v1136
  %v1333 = vunpack.c.l.b16 %v1137
  %v1334 = vunpack.c.h.b16 %v1137
  %v1335 = vunpack.c.l.b16 %v1138
  %v1336 = vunpack.c.h.b16 %v1138
  %v1337 = vunpack.c.l.b16 %v1139
  %v1338 = vunpack.c.h.b16 %v1139
  %v1339 = vunpack.c.l.b16 %v1140
  %v1340 = vunpack.c.h.b16 %v1140
  %v1341 = vunpack.c.l.b16 %v1141
  %v1342 = vunpack.c.h.b16 %v1141
  %v1343 = vunpack.c.l.b16 %v1142
  %v1344 = vunpack.c.h.b16 %v1142
  %v1345 = vunpack.c.l.b16 %v1143
  %v1346 = vunpack.c.h.b16 %v1143
  %v1347 = vunpack.c.l.b16 %v1144
  %v1348 = vunpack.c.h.b16 %v1144
  %v1349 = vunpack.c.l.b16 %v1145
  %v1350 = vunpack.c.h.b16 %v1145
  %v1351 = vunpack.c.l.b16 %v1146
  %v1352 = vunpack.c.h.b16 %v1146
  %v1353 = vunpack.c.l.b16 %v1147
  %v1354 = vunpack.c.h.b16 %v1147
  %v1355 = vunpack.c.l.b16 %v1148
  %v1356 = vunpack.c.h.b16 %v1148
  %v1357 = vunpack.c.l.b16 %v1149
  %v1358 = vunpack.c.h.b16 %v1149
  %v1359 = vunpack.c.l.b16 %v1150
  %v1360 = vunpack.c.h.b16 %v1150
  %v1361 = vunpack.c.l.b16 %v1151
  %v1362 = vunpack.c.h.b16 %v1151
  %v1363 = vunpack.c.l.b16 %v1152
  %v1364 = vunpack.c.h.b16 %v1152
  %v1365 = vunpack.c.l.b16 %v1153
  %v1366 = vunpack.c.h.b16 %v1153
  %v1367 = vunpack.c.l.b16 %v1154
  %v1368 = vunpack.c.h.b16 %v1154
  %v1369 = vunpack.c.l.b16 %v1155
  %v1370 = vunpack.c.h.b16 %v1155
  %v1371 = vunpack.c.l.b16 %v1156
  %v1372 = vunpack.c.h.b16 %v1156
  %v1373 = vunpack.c.l.b16 %v1157
  %v1374 = vunpack.c.h.b16 %v1157
  %v1375 = vunpack.c.l.b16 %v1158
  %v1376 = vunpack.c.h.b16 %v1158
  %v1377 = vunpack.c.l.b16 %v1159
  %v1378 = vunpack.c.h.b16 %v1159
  %v1379 = vunpack.c.l.b16 %v1160
  %v1380 = vunpack.c.h.b16 %v1160
  %v1381 = vunpack.c.l.b16 %v1161
  %v1382 = vunpack.c.h.b16 %v1161
  %v1383 = vunpack.c.l.b16 %v1162
  %v1384 = vunpack.c.h.b16 %v1162
  %v1385 = vunpack.c.l.b16 %v1163
  %v1386 = vunpack.c.h.b16 %v1163
  %v1387 = vunpack.c.l.b16 %v1164
  %v1388 = vunpack.c.h.b16 %v1164
  %v1389 = vpack.c.b16 %v1263, %v1261
  %v1390 = vpack.c.b16 %v1264, %v1262
  %v1391 = vpack.c.b16 %v1267, %v1265
  %v1392 = vpack.c.b16 %v1268, %v1266
  %v1393 = vpack.c.b16 %v1271, %v1269
  %v1394 = vpack.c.b16 %v1272, %v1270
  %v1395 = vpack.c.b16 %v1275, %v1273
  %v1396 = vpack.c.b16 %v1276, %v1274
  %v1397 = vpack.c.b16 %v1279, %v1277
  %v1398 = vpack.c.b16 %v1280, %v1278
  %v1399 = vpack.c.b16 %v1283, %v1281
  %v1400 = vpack.c.b16 %v1284, %v1282
  %v1401 = vpack.c.b16 %v1287, %v1285
  %v1402 = vpack.c.b16 %v1288, %v1286
  %v1403 = vpack.c.b16 %v1291, %v1289
  %v1404 = vpack.c.b16 %v1292, %v1290
  %v1405 = vpack.c.b16 %v1295, %v1293
  %v1406 = vpack.c.b16 %v1296, %v1294
  %v1407 = vpack.c.b16 %v1299, %v1297
  %v1408 = vpack.c.b16 %v1300, %v1298
  %v1409 = vpack.c.b16 %v1303, %v1301
  %v1410 = vpack.c.b16 %v1304, %v1302
  %v1411 = vpack.c.b16 %v1307, %v1305
  %v1412 = vpack.c.b16 %v1308, %v1306
  %v1413 = vpack.c.b16 %v1311, %v1309
  %v1414 = vpack.c.b16 %v1312, %v1310
  %v1415 = vpack.c.b16 %v1315, %v1313
  %v1416 = vpack.c.b16 %v1316, %v1314
  %v1417 = vpack.c.b16 %v1319, %v1317
  %v1418 = vpack.c.b16 %v1320, %v1318
  %v1419 = vpack.c.b16 %v1323, %v1321
  %v1420 = vpack.c.b16 %v1324, %v1322
  %v1421 = vpack.c.b16 %v1327, %v1325
  %v1422 = vpack.c.b16 %v1328, %v1326
  %v1423 = vpack.c.b16 %v1331, %v1329
  %v1424 = vpack.c.b16 %v1332, %v1330
  %v1425 = vpack.c.b16 %v1335, %v1333
  %v1426 = vpack.c.b16 %v1336, %v1334
  %v1427 = vpack.c.b16 %v1339, %v1337
  %v1428 = vpack.c.b16 %v1340, %v1338
  %v1429 = vpack.c.b16 %v1343, %v1341
  %v1430 = vpack.c.b16 %v1344, %v1342
  %v1431 = vpack.c.b16 %v1347, %v1345
  %v1432 = vpack.c.b16 %v1348, %v1346
  %v1433 = vpack.c.b16 %v1351, %v1349
  %v1434 = vpack.c.b16 %v1352, %v1350
  %v1435 = vpack.c.b16 %v1355, %v1353
  %v1436 = vpack.c.b16 %v1356, %v1354
  %v1437 = vpack.c.b16 %v1359, %v1357
  %v1438 = vpack.c.b16 %v1360, %v1358
  %v1439 = vpack.c.b16 %v1363, %v1361
  %v1440 = vpack.c.b16 %v1364, %v1362
  %v1441 = vpack.c.b16 %v1367, %v1365
  %v1442 = vpack.c.b16 %v1368, %v1366
  %v1443 = vpack.c.b16 %v1371, %v1369
  %v1444 = vpack.c.b16 %v1372, %v1370
  %v1445 = vpack.c.b16 %v1375, %v1373
  %v1446 = vpack.c.b16 %v1376, %v1374
  %v1447 = vpack.c.b16 %v1379, %v1377
  %v1448 = vpack.c.b16 %v1380, %v1378
  %v1449 = vpack.c.b16 %v1383, %v1381
  %v1450 = vpack.c.b16 %v1384, %v1382
  %v1451 = vpack.c.b16 %v1387, %v1385
  %v1452 = vpack.c.b16 %v1388, %v1386
  %1517 = vmatprep.subr.bf16.mxu0 %v1390
  %1518 = vmatpush1.bf16.msra.mxu0 %v1389
  %1519 = vmatprep.subr.bf16.mxu0 %v1392
  %1520 = vmatpush1.bf16.msra.mxu0 %v1391
  %1521 = vmatprep.subr.bf16.mxu0 %v1394
  %1522 = vmatpush1.bf16.msra.mxu0 %v1393
  %1523 = vmatprep.subr.bf16.mxu0 %v1396
  %1524 = vmatpush1.bf16.msra.mxu0 %v1395
  %1525 = vmatprep.subr.bf16.mxu0 %v1398
  %1526 = vmatpush1.bf16.msra.mxu0 %v1397
  %1527 = vmatprep.subr.bf16.mxu0 %v1400
  %1528 = vmatpush1.bf16.msra.mxu0 %v1399
  %1529 = vmatprep.subr.bf16.mxu0 %v1402
  %1530 = vmatpush1.bf16.msra.mxu0 %v1401
  %1531 = vmatprep.subr.bf16.mxu0 %v1404
  %1532 = vmatpush1.bf16.msra.mxu0 %v1403
  %1533 = vmatprep.subr.bf16.mxu0 %v1406
  %1534 = vmatpush1.bf16.msra.mxu0 %v1405
  %1535 = vmatprep.subr.bf16.mxu0 %v1408
  %1536 = vmatpush1.bf16.msra.mxu0 %v1407
  %1537 = vmatprep.subr.bf16.mxu0 %v1410
  %1538 = vmatpush1.bf16.msra.mxu0 %v1409
  %1539 = vmatprep.subr.bf16.mxu0 %v1412
  %1540 = vmatpush1.bf16.msra.mxu0 %v1411
  %1541 = vmatprep.subr.bf16.mxu0 %v1414
  %1542 = vmatpush1.bf16.msra.mxu0 %v1413
  %1543 = vmatprep.subr.bf16.mxu0 %v1416
  %1544 = vmatpush1.bf16.msra.mxu0 %v1415
  %1545 = vmatprep.subr.bf16.mxu0 %v1418
  %1546 = vmatpush1.bf16.msra.mxu0 %v1417
  %1547 = vmatprep.subr.bf16.mxu0 %v1420
  %1548 = vmatpush1.bf16.msra.mxu0 %v1419
  %1549 = vmatprep.mubr.bf16.mxu0 %v1190
  %1550 = vmatmul.mubr.bf16.gmra.mrb[0].mxu0 %v1189
  %v1551 = vpop.f32.mrb[0].mxu0
  %v1552 = vadd.f32 %v1170, %v1551
  %v1553 = vpop.f32.mrb[0].mxu0
  %v1554 = vadd.f32 %v1174, %v1553
  %v1555 = vpop.f32.mrb[0].mxu0
  %v1556 = vadd.f32 %v1170, %v1555
  %v1557 = vpop.f32.mrb[0].mxu0
  %v1558 = vadd.f32 %v1174, %v1557
  %1559 = vdwg.mxu0
  %1560 = vmatprep.subr.bf16.mxu0 %v1422
  %1561 = vmatpush1.bf16.msra.mxu0 %v1421
  %1562 = vmatprep.subr.bf16.mxu0 %v1424
  %1563 = vmatpush1.bf16.msra.mxu0 %v1423
  %1564 = vmatprep.subr.bf16.mxu0 %v1426
  %1565 = vmatpush1.bf16.msra.mxu0 %v1425
  %1566 = vmatprep.subr.bf16.mxu0 %v1428
  %1567 = vmatpush1.bf16.msra.mxu0 %v1427
  %1568 = vmatprep.subr.bf16.mxu0 %v1430
  %1569 = vmatpush1.bf16.msra.mxu0 %v1429
  %1570 = vmatprep.subr.bf16.mxu0 %v1432
  %1571 = vmatpush1.bf16.msra.mxu0 %v1431
  %1572 = vmatprep.subr.bf16.mxu0 %v1434
  %1573 = vmatpush1.bf16.msra.mxu0 %v1433
  %1574 = vmatprep.subr.bf16.mxu0 %v1436
  %1575 = vmatpush1.bf16.msra.mxu0 %v1435
  %1576 = vmatprep.subr.bf16.mxu0 %v1438
  %1577 = vmatpush1.bf16.msra.mxu0 %v1437
  %1578 = vmatprep.subr.bf16.mxu0 %v1440
  %1579 = vmatpush1.bf16.msra.mxu0 %v1439
  %1580 = vmatprep.subr.bf16.mxu0 %v1442
  %1581 = vmatpush1.bf16.msra.mxu0 %v1441
  %1582 = vmatprep.subr.bf16.mxu0 %v1444
  %1583 = vmatpush1.bf16.msra.mxu0 %v1443
  %1584 = vmatprep.subr.bf16.mxu0 %v1446
  %1585 = vmatpush1.bf16.msra.mxu0 %v1445
  %1586 = vmatprep.subr.bf16.mxu0 %v1448
  %1587 = vmatpush1.bf16.msra.mxu0 %v1447
  %1588 = vmatprep.subr.bf16.mxu0 %v1450
  %1589 = vmatpush1.bf16.msra.mxu0 %v1449
  %1590 = vmatprep.subr.bf16.mxu0 %v1452
  %1591 = vmatpush1.bf16.msra.mxu0 %v1451
  %1592 = vmatprep.mubr.bf16.mxu0 %v1192
  %1593 = vmatmul.mubr.bf16.gmra.mrb[0].mxu0 %v1191
  %v1594 = vpop.f32.mrb[0].mxu0
  %v1595 = vadd.f32 %v1552, %v1594
  %v1596 = vpop.f32.mrb[0].mxu0
  %v1597 = vadd.f32 %v1554, %v1596
  %v1598 = vpop.f32.mrb[0].mxu0
  %v1599 = vadd.f32 %v1556, %v1598
  %v1600 = vpop.f32.mrb[0].mxu0
  %v1601 = vadd.f32 %v1558, %v1600
  %1602 = vdwg.mxu0
  %v1603 = vmul.f32 %v1595, 0.5
  %v1604 = vmul.f32 %v1597, 0.5
  %v1605 = vmul.f32 %v1599, 0.5
  %v1606 = vmul.f32 %v1601, 0.5
  %v1607 = vmul.f32 %v1595, 0.70710677
  %v1608 = vmul.f32 %v1597, 0.70710677
  %v1609 = vmul.f32 %v1599, 0.70710677
  %v1610 = vmul.f32 %v1601, 0.70710677
  %v1611 = verf.f32.pop %v1607
  %v1612 = verf.f32.pop %v1608
  %v1613 = verf.f32.pop %v1609
  %v1614 = verf.f32.pop %v1610
  %v1615 = vadd.f32 %v1611, 1.0
  %v1616 = vadd.f32 %v1612, 1.0
  %v1617 = vadd.f32 %v1613, 1.0
  %v1618 = vadd.f32 %v1614, 1.0
  %v1619 = vmul.f32 %v1603, %v1615
  %v1620 = vmul.f32 %v1604, %v1616
  %v1621 = vmul.f32 %v1605, %v1617
  %v1622 = vmul.f32 %v1606, %v1618
  %v1623 = vpack.c.bf16 %v1621, %v1619
  %v1624 = vpack.c.bf16 %v1622, %v1620
  %v1625 = vld [vmem:[%s8] sm:$0xff]
  %v1626 = vld [vmem:[%s8 + $0x8] sm:$0xff]
  %v1627 = vld [vmem:[%s8 + $0x10] sm:$0xff]
  %v1628 = vld [vmem:[%s8 + $0x18] sm:$0xff]
  %v1629 = vld [vmem:[%s8 + $0x20] sm:$0xff]
  %v1630 = vld [vmem:[%s8 + $0x28] sm:$0xff]
  %v1631 = vld [vmem:[%s8 + $0x30] sm:$0xff]
  %v1632 = vld [vmem:[%s8 + $0x38] sm:$0xff]
  %v1633 = vld [vmem:[%s8 + $0x40] sm:$0xff]
  %v1634 = vld [vmem:[%s8 + $0x48] sm:$0xff]
  %v1635 = vld [vmem:[%s8 + $0x50] sm:$0xff]
  %v1636 = vld [vmem:[%s8 + $0x58] sm:$0xff]
  %v1637 = vld [vmem:[%s8 + $0x60] sm:$0xff]
  %v1638 = vld [vmem:[%s8 + $0x68] sm:$0xff]
  %v1639 = vld [vmem:[%s8 + $0x70] sm:$0xff]
  %v1640 = vld [vmem:[%s8 + $0x78] sm:$0xff]
  %v1641 = vld [vmem:[%s8 + $0x80] sm:$0xff]
  %v1642 = vld [vmem:[%s8 + $0x88] sm:$0xff]
  %v1643 = vld [vmem:[%s8 + $0x90] sm:$0xff]
  %v1644 = vld [vmem:[%s8 + $0x98] sm:$0xff]
  %v1645 = vld [vmem:[%s8 + $0xa0] sm:$0xff]
  %v1646 = vld [vmem:[%s8 + $0xa8] sm:$0xff]
  %v1647 = vld [vmem:[%s8 + $0xb0] sm:$0xff]
  %v1648 = vld [vmem:[%s8 + $0xb8] sm:$0xff]
  %v1649 = vld [vmem:[%s8 + $0xc0] sm:$0xff]
  %v1650 = vld [vmem:[%s8 + $0xc8] sm:$0xff]
  %v1651 = vld [vmem:[%s8 + $0xd0] sm:$0xff]
  %v1652 = vld [vmem:[%s8 + $0xd8] sm:$0xff]
  %v1653 = vld [vmem:[%s8 + $0xe0] sm:$0xff]
  %v1654 = vld [vmem:[%s8 + $0xe8] sm:$0xff]
  %v1655 = vld [vmem:[%s8 + $0xf0] sm:$0xff]
  %v1656 = vld [vmem:[%s8 + $0xf8] sm:$0xff]
  %v1657 = vld [vmem:[%s8 + $0x100] sm:$0xff]
  %v1658 = vld [vmem:[%s8 + $0x108] sm:$0xff]
  %v1659 = vld [vmem:[%s8 + $0x110] sm:$0xff]
  %v1660 = vld [vmem:[%s8 + $0x118] sm:$0xff]
  %v1661 = vld [vmem:[%s8 + $0x120] sm:$0xff]
  %v1662 = vld [vmem:[%s8 + $0x128] sm:$0xff]
  %v1663 = vld [vmem:[%s8 + $0x130] sm:$0xff]
  %v1664 = vld [vmem:[%s8 + $0x138] sm:$0xff]
  %v1665 = vld [vmem:[%s8 + $0x140] sm:$0xff]
  %v1666 = vld [vmem:[%s8 + $0x148] sm:$0xff]
  %v1667 = vld [vmem:[%s8 + $0x150] sm:$0xff]
  %v1668 = vld [vmem:[%s8 + $0x158] sm:$0xff]
  %v1669 = vld [vmem:[%s8 + $0x160] sm:$0xff]
  %v1670 = vld [vmem:[%s8 + $0x168] sm:$0xff]
  %v1671 = vld [vmem:[%s8 + $0x170] sm:$0xff]
  %v1672 = vld [vmem:[%s8 + $0x178] sm:$0xff]
  %v1673 = vld [vmem:[%s8 + $0x180] sm:$0xff]
  %v1674 = vld [vmem:[%s8 + $0x188] sm:$0xff]
  %v1675 = vld [vmem:[%s8 + $0x190] sm:$0xff]
  %v1676 = vld [vmem:[%s8 + $0x198] sm:$0xff]
  %v1677 = vld [vmem:[%s8 + $0x1a0] sm:$0xff]
  %v1678 = vld [vmem:[%s8 + $0x1a8] sm:$0xff]
  %v1679 = vld [vmem:[%s8 + $0x1b0] sm:$0xff]
  %v1680 = vld [vmem:[%s8 + $0x1b8] sm:$0xff]
  %v1681 = vld [vmem:[%s8 + $0x1c0] sm:$0xff]
  %v1682 = vld [vmem:[%s8 + $0x1c8] sm:$0xff]
  %v1683 = vld [vmem:[%s8 + $0x1d0] sm:$0xff]
  %v1684 = vld [vmem:[%s8 + $0x1d8] sm:$0xff]
  %v1685 = vld [vmem:[%s8 + $0x1e0] sm:$0xff]
  %v1686 = vld [vmem:[%s8 + $0x1e8] sm:$0xff]
  %v1687 = vld [vmem:[%s8 + $0x1f0] sm:$0xff]
  %v1688 = vld [vmem:[%s8 + $0x1f8] sm:$0xff]
  %v1689 = vld [vmem:[%s9] sm:$0xf]
  %v1691 = vlaneseq
  %v1692 = vshrl.u32 %v1691, 7
  %v1693 = vsub.s32 0, %v1692
  %v1694 = vrot.slane %v1689, %v1693
  %v1695 = vlaneseq
  %v1696 = vshrl.u32 %v1695, 7
  %v1697 = vsub.s32 1, %v1696
  %v1698 = vrot.slane %v1689, %v1697
  %v1699 = vlaneseq
  %v1700 = vshrl.u32 %v1699, 7
  %v1701 = vsub.s32 2, %v1700
  %v1702 = vrot.slane %v1689, %v1701
  %v1703 = vlaneseq
  %v1704 = vshrl.u32 %v1703, 7
  %v1705 = vsub.s32 3, %v1704
  %v1706 = vrot.slane %v1689, %v1705
  %v1775 = vunpack.c.l.b16 %v1625
  %v1776 = vunpack.c.h.b16 %v1625
  %v1777 = vunpack.c.l.b16 %v1626
  %v1778 = vunpack.c.h.b16 %v1626
  %v1779 = vunpack.c.l.b16 %v1627
  %v1780 = vunpack.c.h.b16 %v1627
  %v1781 = vunpack.c.l.b16 %v1628
  %v1782 = vunpack.c.h.b16 %v1628
  %v1783 = vunpack.c.l.b16 %v1629
  %v1784 = vunpack.c.h.b16 %v1629
  %v1785 = vunpack.c.l.b16 %v1630
  %v1786 = vunpack.c.h.b16 %v1630
  %v1787 = vunpack.c.l.b16 %v1631
  %v1788 = vunpack.c.h.b16 %v1631
  %v1789 = vunpack.c.l.b16 %v1632
  %v1790 = vunpack.c.h.b16 %v1632
  %v1791 = vunpack.c.l.b16 %v1633
  %v1792 = vunpack.c.h.b16 %v1633
  %v1793 = vunpack.c.l.b16 %v1634
  %v1794 = vunpack.c.h.b16 %v1634
  %v1795 = vunpack.c.l.b16 %v1635
  %v1796 = vunpack.c.h.b16 %v1635
  %v1797 = vunpack.c.l.b16 %v1636
  %v1798 = vunpack.c.h.b16 %v1636
  %v1799 = vunpack.c.l.b16 %v1637
  %v1800 = vunpack.c.h.b16 %v1637
  %v1801 = vunpack.c.l.b16 %v1638
  %v1802 = vunpack.c.h.b16 %v1638
  %v1803 = vunpack.c.l.b16 %v1639
  %v1804 = vunpack.c.h.b16 %v1639
  %v1805 = vunpack.c.l.b16 %v1640
  %v1806 = vunpack.c.h.b16 %v1640
  %v1807 = vunpack.c.l.b16 %v1641
  %v1808 = vunpack.c.h.b16 %v1641
  %v1809 = vunpack.c.l.b16 %v1642
  %v1810 = vunpack.c.h.b16 %v1642
  %v1811 = vunpack.c.l.b16 %v1643
  %v1812 = vunpack.c.h.b16 %v1643
  %v1813 = vunpack.c.l.b16 %v1644
  %v1814 = vunpack.c.h.b16 %v1644
  %v1815 = vunpack.c.l.b16 %v1645
  %v1816 = vunpack.c.h.b16 %v1645
  %v1817 = vunpack.c.l.b16 %v1646
  %v1818 = vunpack.c.h.b16 %v1646
  %v1819 = vunpack.c.l.b16 %v1647
  %v1820 = vunpack.c.h.b16 %v1647
  %v1821 = vunpack.c.l.b16 %v1648
  %v1822 = vunpack.c.h.b16 %v1648
  %v1823 = vunpack.c.l.b16 %v1649
  %v1824 = vunpack.c.h.b16 %v1649
  %v1825 = vunpack.c.l.b16 %v1650
  %v1826 = vunpack.c.h.b16 %v1650
  %v1827 = vunpack.c.l.b16 %v1651
  %v1828 = vunpack.c.h.b16 %v1651
  %v1829 = vunpack.c.l.b16 %v1652
  %v1830 = vunpack.c.h.b16 %v1652
  %v1831 = vunpack.c.l.b16 %v1653
  %v1832 = vunpack.c.h.b16 %v1653
  %v1833 = vunpack.c.l.b16 %v1654
  %v1834 = vunpack.c.h.b16 %v1654
  %v1835 = vunpack.c.l.b16 %v1655
  %v1836 = vunpack.c.h.b16 %v1655
  %v1837 = vunpack.c.l.b16 %v1656
  %v1838 = vunpack.c.h.b16 %v1656
  %v1839 = vunpack.c.l.b16 %v1657
  %v1840 = vunpack.c.h.b16 %v1657
  %v1841 = vunpack.c.l.b16 %v1658
  %v1842 = vunpack.c.h.b16 %v1658
  %v1843 = vunpack.c.l.b16 %v1659
  %v1844 = vunpack.c.h.b16 %v1659
  %v1845 = vunpack.c.l.b16 %v1660
  %v1846 = vunpack.c.h.b16 %v1660
  %v1847 = vunpack.c.l.b16 %v1661
  %v1848 = vunpack.c.h.b16 %v1661
  %v1849 = vunpack.c.l.b16 %v1662
  %v1850 = vunpack.c.h.b16 %v1662
  %v1851 = vunpack.c.l.b16 %v1663
  %v1852 = vunpack.c.h.b16 %v1663
  %v1853 = vunpack.c.l.b16 %v1664
  %v1854 = vunpack.c.h.b16 %v1664
  %v1855 = vunpack.c.l.b16 %v1665
  %v1856 = vunpack.c.h.b16 %v1665
  %v1857 = vunpack.c.l.b16 %v1666
  %v1858 = vunpack.c.h.b16 %v1666
  %v1859 = vunpack.c.l.b16 %v1667
  %v1860 = vunpack.c.h.b16 %v1667
  %v1861 = vunpack.c.l.b16 %v1668
  %v1862 = vunpack.c.h.b16 %v1668
  %v1863 = vunpack.c.l.b16 %v1669
  %v1864 = vunpack.c.h.b16 %v1669
  %v1865 = vunpack.c.l.b16 %v1670
  %v1866 = vunpack.c.h.b16 %v1670
  %v1867 = vunpack.c.l.b16 %v1671
  %v1868 = vunpack.c.h.b16 %v1671
  %v1869 = vunpack.c.l.b16 %v1672
  %v1870 = vunpack.c.h.b16 %v1672
  %v1871 = vunpack.c.l.b16 %v1673
  %v1872 = vunpack.c.h.b16 %v1673
  %v1873 = vunpack.c.l.b16 %v1674
  %v1874 = vunpack.c.h.b16 %v1674
  %v1875 = vunpack.c.l.b16 %v1675
  %v1876 = vunpack.c.h.b16 %v1675
  %v1877 = vunpack.c.l.b16 %v1676
  %v1878 = vunpack.c.h.b16 %v1676
  %v1879 = vunpack.c.l.b16 %v1677
  %v1880 = vunpack.c.h.b16 %v1677
  %v1881 = vunpack.c.l.b16 %v1678
  %v1882 = vunpack.c.h.b16 %v1678
  %v1883 = vunpack.c.l.b16 %v1679
  %v1884 = vunpack.c.h.b16 %v1679
  %v1885 = vunpack.c.l.b16 %v1680
  %v1886 = vunpack.c.h.b16 %v1680
  %v1887 = vunpack.c.l.b16 %v1681
  %v1888 = vunpack.c.h.b16 %v1681
  %v1889 = vunpack.c.l.b16 %v1682
  %v1890 = vunpack.c.h.b16 %v1682
  %v1891 = vunpack.c.l.b16 %v1683
  %v1892 = vunpack.c.h.b16 %v1683
  %v1893 = vunpack.c.l.b16 %v1684
  %v1894 = vunpack.c.h.b16 %v1684
  %v1895 = vunpack.c.l.b16 %v1685
  %v1896 = vunpack.c.h.b16 %v1685
  %v1897 = vunpack.c.l.b16 %v1686
  %v1898 = vunpack.c.h.b16 %v1686
  %v1899 = vunpack.c.l.b16 %v1687
  %v1900 = vunpack.c.h.b16 %v1687
  %v1901 = vunpack.c.l.b16 %v1688
  %v1902 = vunpack.c.h.b16 %v1688
  %v1903 = vpack.c.b16 %v1779, %v1775
  %v1904 = vpack.c.b16 %v1780, %v1776
  %v1905 = vpack.c.b16 %v1781, %v1777
  %v1906 = vpack.c.b16 %v1782, %v1778
  %v1907 = vpack.c.b16 %v1787, %v1783
  %v1908 = vpack.c.b16 %v1788, %v1784
  %v1909 = vpack.c.b16 %v1789, %v1785
  %v1910 = vpack.c.b16 %v1790, %v1786
  %v1911 = vpack.c.b16 %v1795, %v1791
  %v1912 = vpack.c.b16 %v1796, %v1792
  %v1913 = vpack.c.b16 %v1797, %v1793
  %v1914 = vpack.c.b16 %v1798, %v1794
  %v1915 = vpack.c.b16 %v1803, %v1799
  %v1916 = vpack.c.b16 %v1804, %v1800
  %v1917 = vpack.c.b16 %v1805, %v1801
  %v1918 = vpack.c.b16 %v1806, %v1802
  %v1919 = vpack.c.b16 %v1811, %v1807
  %v1920 = vpack.c.b16 %v1812, %v1808
  %v1921 = vpack.c.b16 %v1813, %v1809
  %v1922 = vpack.c.b16 %v1814, %v1810
  %v1923 = vpack.c.b16 %v1819, %v1815
  %v1924 = vpack.c.b16 %v1820, %v1816
  %v1925 = vpack.c.b16 %v1821, %v1817
  %v1926 = vpack.c.b16 %v1822, %v1818
  %v1927 = vpack.c.b16 %v1827, %v1823
  %v1928 = vpack.c.b16 %v1828, %v1824
  %v1929 = vpack.c.b16 %v1829, %v1825
  %v1930 = vpack.c.b16 %v1830, %v1826
  %v1931 = vpack.c.b16 %v1835, %v1831
  %v1932 = vpack.c.b16 %v1836, %v1832
  %v1933 = vpack.c.b16 %v1837, %v1833
  %v1934 = vpack.c.b16 %v1838, %v1834
  %v1935 = vpack.c.b16 %v1843, %v1839
  %v1936 = vpack.c.b16 %v1844, %v1840
  %v1937 = vpack.c.b16 %v1845, %v1841
  %v1938 = vpack.c.b16 %v1846, %v1842
  %v1939 = vpack.c.b16 %v1851, %v1847
  %v1940 = vpack.c.b16 %v1852, %v1848
  %v1941 = vpack.c.b16 %v1853, %v1849
  %v1942 = vpack.c.b16 %v1854, %v1850
  %v1943 = vpack.c.b16 %v1859, %v1855
  %v1944 = vpack.c.b16 %v1860, %v1856
  %v1945 = vpack.c.b16 %v1861, %v1857
  %v1946 = vpack.c.b16 %v1862, %v1858
  %v1947 = vpack.c.b16 %v1867, %v1863
  %v1948 = vpack.c.b16 %v1868, %v1864
  %v1949 = vpack.c.b16 %v1869, %v1865
  %v1950 = vpack.c.b16 %v1870, %v1866
  %v1951 = vpack.c.b16 %v1875, %v1871
  %v1952 = vpack.c.b16 %v1876, %v1872
  %v1953 = vpack.c.b16 %v1877, %v1873
  %v1954 = vpack.c.b16 %v1878, %v1874
  %v1955 = vpack.c.b16 %v1883, %v1879
  %v1956 = vpack.c.b16 %v1884, %v1880
  %v1957 = vpack.c.b16 %v1885, %v1881
  %v1958 = vpack.c.b16 %v1886, %v1882
  %v1959 = vpack.c.b16 %v1891, %v1887
  %v1960 = vpack.c.b16 %v1892, %v1888
  %v1961 = vpack.c.b16 %v1893, %v1889
  %v1962 = vpack.c.b16 %v1894, %v1890
  %v1963 = vpack.c.b16 %v1899, %v1895
  %v1964 = vpack.c.b16 %v1900, %v1896
  %v1965 = vpack.c.b16 %v1901, %v1897
  %v1966 = vpack.c.b16 %v1902, %v1898
  %2031 = vmatprep.subr.bf16.mxu0 %v1904
  %2032 = vmatpush1.bf16.msra.mxu0 %v1903
  %2033 = vmatprep.subr.bf16.mxu0 %v1908
  %2034 = vmatpush1.bf16.msra.mxu0 %v1907
  %2035 = vmatprep.subr.bf16.mxu0 %v1912
  %2036 = vmatpush1.bf16.msra.mxu0 %v1911
  %2037 = vmatprep.subr.bf16.mxu0 %v1916
  %2038 = vmatpush1.bf16.msra.mxu0 %v1915
  %2039 = vmatprep.subr.bf16.mxu0 %v1920
  %2040 = vmatpush1.bf16.msra.mxu0 %v1919
  %2041 = vmatprep.subr.bf16.mxu0 %v1924
  %2042 = vmatpush1.bf16.msra.mxu0 %v1923
  %2043 = vmatprep.subr.bf16.mxu0 %v1928
  %2044 = vmatpush1.bf16.msra.mxu0 %v1927
  %2045 = vmatprep.subr.bf16.mxu0 %v1932
  %2046 = vmatpush1.bf16.msra.mxu0 %v1931
  %2047 = vmatprep.subr.bf16.mxu0 %v1936
  %2048 = vmatpush1.bf16.msra.mxu0 %v1935
  %2049 = vmatprep.subr.bf16.mxu0 %v1940
  %2050 = vmatpush1.bf16.msra.mxu0 %v1939
  %2051 = vmatprep.subr.bf16.mxu0 %v1944
  %2052 = vmatpush1.bf16.msra.mxu0 %v1943
  %2053 = vmatprep.subr.bf16.mxu0 %v1948
  %2054 = vmatpush1.bf16.msra.mxu0 %v1947
  %2055 = vmatprep.subr.bf16.mxu0 %v1952
  %2056 = vmatpush1.bf16.msra.mxu0 %v1951
  %2057 = vmatprep.subr.bf16.mxu0 %v1956
  %2058 = vmatpush1.bf16.msra.mxu0 %v1955
  %2059 = vmatprep.subr.bf16.mxu0 %v1960
  %2060 = vmatpush1.bf16.msra.mxu0 %v1959
  %2061 = vmatprep.subr.bf16.mxu0 %v1964
  %2062 = vmatpush1.bf16.msra.mxu0 %v1963
  %2063 = vmatprep.mubr.bf16.mxu0 %v1624
  %2064 = vmatmul.mubr.bf16.gmra.mrb[0].mxu0 %v1623
  %v2065 = vpop.f32.mrb[0].mxu0
  %v2066 = vadd.f32 %v1694, %v2065
  %v2067 = vpop.f32.mrb[0].mxu0
  %v2068 = vadd.f32 %v1698, %v2067
  %v2069 = vpop.f32.mrb[0].mxu0
  %v2070 = vadd.f32 %v1694, %v2069
  %v2071 = vpop.f32.mrb[0].mxu0
  %v2072 = vadd.f32 %v1698, %v2071
  %2073 = vdwg.mxu0
  %2074 = vmatprep.subr.bf16.mxu0 %v1906
  %2075 = vmatpush1.bf16.msra.mxu0 %v1905
  %2076 = vmatprep.subr.bf16.mxu0 %v1910
  %2077 = vmatpush1.bf16.msra.mxu0 %v1909
  %2078 = vmatprep.subr.bf16.mxu0 %v1914
  %2079 = vmatpush1.bf16.msra.mxu0 %v1913
  %2080 = vmatprep.subr.bf16.mxu0 %v1918
  %2081 = vmatpush1.bf16.msra.mxu0 %v1917
  %2082 = vmatprep.subr.bf16.mxu0 %v1922
  %2083 = vmatpush1.bf16.msra.mxu0 %v1921
  %2084 = vmatprep.subr.bf16.mxu0 %v1926
  %2085 = vmatpush1.bf16.msra.mxu0 %v1925
  %2086 = vmatprep.subr.bf16.mxu0 %v1930
  %2087 = vmatpush1.bf16.msra.mxu0 %v1929
  %2088 = vmatprep.subr.bf16.mxu0 %v1934
  %2089 = vmatpush1.bf16.msra.mxu0 %v1933
  %2090 = vmatprep.subr.bf16.mxu0 %v1938
  %2091 = vmatpush1.bf16.msra.mxu0 %v1937
  %2092 = vmatprep.subr.bf16.mxu0 %v1942
  %2093 = vmatpush1.bf16.msra.mxu0 %v1941
  %2094 = vmatprep.subr.bf16.mxu0 %v1946
  %2095 = vmatpush1.bf16.msra.mxu0 %v1945
  %2096 = vmatprep.subr.bf16.mxu0 %v1950
  %2097 = vmatpush1.bf16.msra.mxu0 %v1949
  %2098 = vmatprep.subr.bf16.mxu0 %v1954
  %2099 = vmatpush1.bf16.msra.mxu0 %v1953
  %2100 = vmatprep.subr.bf16.mxu0 %v1958
  %2101 = vmatpush1.bf16.msra.mxu0 %v1957
  %2102 = vmatprep.subr.bf16.mxu0 %v1962
  %2103 = vmatpush1.bf16.msra.mxu0 %v1961
  %2104 = vmatprep.subr.bf16.mxu0 %v1966
  %2105 = vmatpush1.bf16.msra.mxu0 %v1965
  %2106 = vmatprep.mubr.bf16.mxu0 %v1624
  %2107 = vmatmul.mubr.bf16.gmra.mrb[0].mxu0 %v1623
  %v2108 = vpop.f32.mrb[0].mxu0
  %v2109 = vadd.f32 %v1702, %v2108
  %v2110 = vpop.f32.mrb[0].mxu0
  %v2111 = vadd.f32 %v1706, %v2110
  %v2112 = vpop.f32.mrb[0].mxu0
  %v2113 = vadd.f32 %v1702, %v2112
  %v2114 = vpop.f32.mrb[0].mxu0
  %v2115 = vadd.f32 %v1706, %v2114
  %2116 = vdwg.mxu0
  %v2117 = vmul.f32 %v2066, 0.05
  %v2118 = vmul.f32 %v2068, 0.05
  %v2119 = vmul.f32 %v2109, 0.05
  %v2120 = vmul.f32 %v2111, 0.05
  %v2121 = vmul.f32 %v2070, 0.05
  %v2122 = vmul.f32 %v2072, 0.05
  %v2123 = vmul.f32 %v2113, 0.05
  %v2124 = vmul.f32 %v2115, 0.05
  %v2125 = vadd.f32 %v61, %v2117
  %v2126 = vadd.f32 %v62, %v2118
  %v2127 = vadd.f32 %v63, %v2119
  %v2128 = vadd.f32 %v64, %v2120
  %v2129 = vadd.f32 %v65, %v2121
  %v2130 = vadd.f32 %v66, %v2122
  %v2131 = vadd.f32 %v67, %v2123
  %v2132 = vadd.f32 %v68, %v2124
  %v2133 = vmul.f32 %v1093, %v1093
  %v2134 = vmul.f32 %v1094, %v1094
  %v2135 = vmul.f32 %v1095, %v1095
  %v2136 = vmul.f32 %v1096, %v1096
  %v2137 = vmul.f32 %v1097, %v1097
  %v2138 = vmul.f32 %v1098, %v1098
  %v2139 = vmul.f32 %v1099, %v1099
  %v2140 = vmul.f32 %v1100, %v1100
  %v2141 = vadd.f32 %v2133, %v2134
  %v2142 = vadd.f32 %v2141, %v2135
  %v2143 = vadd.f32 %v2142, %v2136
  %2144 = vadd.xlane.f32.xlu0 %v2143
  %v2145 = vpop.xlane.xlu0 %2144
  %v2146 = vadd.f32 %v2137, %v2138
  %v2147 = vadd.f32 %v2146, %v2139
  %v2148 = vadd.f32 %v2147, %v2140
  %2149 = vadd.xlane.f32.xlu0 %v2148
  %v2150 = vpop.xlane.xlu0 %2149
  %v2151 = vadd.f32 %v2145, 1e-12
  %v2152 = vadd.f32 %v2150, 1e-12
  %v2153 = vrsqrt.pop %v2151
  %v2154 = vrsqrt.pop %v2152
  %v2155 = vmul.f32 %v1093, %v2153
  %v2156 = vmul.f32 %v1094, %v2153
  %v2157 = vmul.f32 %v1095, %v2153
  %v2158 = vmul.f32 %v1096, %v2153
  %v2159 = vmul.f32 %v1097, %v2154
  %v2160 = vmul.f32 %v1098, %v2154
  %v2161 = vmul.f32 %v1099, %v2154
  %v2162 = vmul.f32 %v1100, %v2154
  %v2163 = vmul.f32 %v2125, %v2125
  %v2164 = vmul.f32 %v2126, %v2126
  %v2165 = vmul.f32 %v2127, %v2127
  %v2166 = vmul.f32 %v2128, %v2128
  %v2167 = vmul.f32 %v2129, %v2129
  %v2168 = vmul.f32 %v2130, %v2130
  %v2169 = vmul.f32 %v2131, %v2131
  %v2170 = vmul.f32 %v2132, %v2132
  %v2171 = vadd.f32 %v2163, %v2164
  %v2172 = vadd.f32 %v2171, %v2165
  %v2173 = vadd.f32 %v2172, %v2166
  %2174 = vadd.xlane.f32.xlu0 %v2173
  %v2175 = vpop.xlane.xlu0 %2174
  %v2176 = vadd.f32 %v2167, %v2168
  %v2177 = vadd.f32 %v2176, %v2169
  %v2178 = vadd.f32 %v2177, %v2170
  %2179 = vadd.xlane.f32.xlu0 %v2178
  %v2180 = vpop.xlane.xlu0 %2179
  %v2181 = vadd.f32 %v2175, 1e-12
  %v2182 = vadd.f32 %v2180, 1e-12
  %v2183 = vrsqrt.pop %v2181
  %v2184 = vrsqrt.pop %v2182
  %v2185 = vmul.f32 %v2125, %v2183
  %v2186 = vmul.f32 %v2126, %v2183
  %v2187 = vmul.f32 %v2127, %v2183
  %v2188 = vmul.f32 %v2128, %v2183
  %v2189 = vmul.f32 %v2129, %v2184
  %v2190 = vmul.f32 %v2130, %v2184
  %v2191 = vmul.f32 %v2131, %v2184
  %v2192 = vmul.f32 %v2132, %v2184
  %v2193 = vpack.c.bf16 %v2159, %v2155
  %v2194 = vpack.c.bf16 %v2160, %v2156
  %v2195 = vpack.c.bf16 %v2161, %v2157
  %v2196 = vpack.c.bf16 %v2162, %v2158
  %v2197 = vld [vmem:[%s10] sm:$0xf]
  %v2198 = vld [vmem:[%s10 + $0x4] sm:$0xf]
  %v2199 = vld [vmem:[%s10 + $0x8] sm:$0xf]
  %v2200 = vld [vmem:[%s10 + $0xc] sm:$0xf]
  %v2201 = vld [vmem:[%s10 + $0x10] sm:$0xf]
  %v2202 = vld [vmem:[%s10 + $0x14] sm:$0xf]
  %v2203 = vld [vmem:[%s10 + $0x18] sm:$0xf]
  %v2204 = vld [vmem:[%s10 + $0x1c] sm:$0xf]
  %v2205 = vld [vmem:[%s10 + $0x20] sm:$0xf]
  %v2206 = vld [vmem:[%s10 + $0x24] sm:$0xf]
  %v2207 = vld [vmem:[%s10 + $0x28] sm:$0xf]
  %v2208 = vld [vmem:[%s10 + $0x2c] sm:$0xf]
  %v2209 = vld [vmem:[%s10 + $0x30] sm:$0xf]
  %v2210 = vld [vmem:[%s10 + $0x34] sm:$0xf]
  %v2211 = vld [vmem:[%s10 + $0x38] sm:$0xf]
  %v2212 = vld [vmem:[%s10 + $0x3c] sm:$0xf]
  %v2213 = vld [vmem:[%s10 + $0x40] sm:$0xf]
  %v2214 = vld [vmem:[%s10 + $0x44] sm:$0xf]
  %v2215 = vld [vmem:[%s10 + $0x48] sm:$0xf]
  %v2216 = vld [vmem:[%s10 + $0x4c] sm:$0xf]
  %v2217 = vld [vmem:[%s10 + $0x50] sm:$0xf]
  %v2218 = vld [vmem:[%s10 + $0x54] sm:$0xf]
  %v2219 = vld [vmem:[%s10 + $0x58] sm:$0xf]
  %v2220 = vld [vmem:[%s10 + $0x5c] sm:$0xf]
  %v2221 = vld [vmem:[%s10 + $0x60] sm:$0xf]
  %v2222 = vld [vmem:[%s10 + $0x64] sm:$0xf]
  %v2223 = vld [vmem:[%s10 + $0x68] sm:$0xf]
  %v2224 = vld [vmem:[%s10 + $0x6c] sm:$0xf]
  %v2225 = vld [vmem:[%s10 + $0x70] sm:$0xf]
  %v2226 = vld [vmem:[%s10 + $0x74] sm:$0xf]
  %v2227 = vld [vmem:[%s10 + $0x78] sm:$0xf]
  %v2228 = vld [vmem:[%s10 + $0x7c] sm:$0xf]
  %v2229 = vld [vmem:[%s10 + $0x80] sm:$0xf]
  %v2230 = vld [vmem:[%s10 + $0x84] sm:$0xf]
  %v2231 = vld [vmem:[%s10 + $0x88] sm:$0xf]
  %v2232 = vld [vmem:[%s10 + $0x8c] sm:$0xf]
  %v2233 = vld [vmem:[%s10 + $0x90] sm:$0xf]
  %v2234 = vld [vmem:[%s10 + $0x94] sm:$0xf]
  %v2235 = vld [vmem:[%s10 + $0x98] sm:$0xf]
  %v2236 = vld [vmem:[%s10 + $0x9c] sm:$0xf]
  %v2237 = vld [vmem:[%s10 + $0xa0] sm:$0xf]
  %v2238 = vld [vmem:[%s10 + $0xa4] sm:$0xf]
  %v2239 = vld [vmem:[%s10 + $0xa8] sm:$0xf]
  %v2240 = vld [vmem:[%s10 + $0xac] sm:$0xf]
  %v2241 = vld [vmem:[%s10 + $0xb0] sm:$0xf]
  %v2242 = vld [vmem:[%s10 + $0xb4] sm:$0xf]
  %v2243 = vld [vmem:[%s10 + $0xb8] sm:$0xf]
  %v2244 = vld [vmem:[%s10 + $0xbc] sm:$0xf]
  %v2245 = vld [vmem:[%s10 + $0xc0] sm:$0xf]
  %v2246 = vld [vmem:[%s10 + $0xc4] sm:$0xf]
  %v2247 = vld [vmem:[%s10 + $0xc8] sm:$0xf]
  %v2248 = vld [vmem:[%s10 + $0xcc] sm:$0xf]
  %v2249 = vld [vmem:[%s10 + $0xd0] sm:$0xf]
  %v2250 = vld [vmem:[%s10 + $0xd4] sm:$0xf]
  %v2251 = vld [vmem:[%s10 + $0xd8] sm:$0xf]
  %v2252 = vld [vmem:[%s10 + $0xdc] sm:$0xf]
  %v2253 = vld [vmem:[%s10 + $0xe0] sm:$0xf]
  %v2254 = vld [vmem:[%s10 + $0xe4] sm:$0xf]
  %v2255 = vld [vmem:[%s10 + $0xe8] sm:$0xf]
  %v2256 = vld [vmem:[%s10 + $0xec] sm:$0xf]
  %v2257 = vld [vmem:[%s10 + $0xf0] sm:$0xf]
  %v2258 = vld [vmem:[%s10 + $0xf4] sm:$0xf]
  %v2259 = vld [vmem:[%s10 + $0xf8] sm:$0xf]
  %v2260 = vld [vmem:[%s10 + $0xfc] sm:$0xf]
  %v2261 = vld [vmem:[%s11] sm:$0x1]
  %v2263 = vlaneseq
  %v2264 = vshrl.u32 %v2263, 7
  %v2265 = vsub.s32 0, %v2264
  %v2266 = vrot.slane %v2261, %v2265
  %v2332 = vunpack.c.l.b16 %v2197
  %v2333 = vunpack.c.l.b16 %v2198
  %v2334 = vunpack.c.l.b16 %v2199
  %v2335 = vunpack.c.l.b16 %v2200
  %v2336 = vunpack.c.l.b16 %v2201
  %v2337 = vunpack.c.l.b16 %v2202
  %v2338 = vunpack.c.l.b16 %v2203
  %v2339 = vunpack.c.l.b16 %v2204
  %v2340 = vunpack.c.l.b16 %v2205
  %v2341 = vunpack.c.l.b16 %v2206
  %v2342 = vunpack.c.l.b16 %v2207
  %v2343 = vunpack.c.l.b16 %v2208
  %v2344 = vunpack.c.l.b16 %v2209
  %v2345 = vunpack.c.l.b16 %v2210
  %v2346 = vunpack.c.l.b16 %v2211
  %v2347 = vunpack.c.l.b16 %v2212
  %v2348 = vunpack.c.l.b16 %v2213
  %v2349 = vunpack.c.l.b16 %v2214
  %v2350 = vunpack.c.l.b16 %v2215
  %v2351 = vunpack.c.l.b16 %v2216
  %v2352 = vunpack.c.l.b16 %v2217
  %v2353 = vunpack.c.l.b16 %v2218
  %v2354 = vunpack.c.l.b16 %v2219
  %v2355 = vunpack.c.l.b16 %v2220
  %v2356 = vunpack.c.l.b16 %v2221
  %v2357 = vunpack.c.l.b16 %v2222
  %v2358 = vunpack.c.l.b16 %v2223
  %v2359 = vunpack.c.l.b16 %v2224
  %v2360 = vunpack.c.l.b16 %v2225
  %v2361 = vunpack.c.l.b16 %v2226
  %v2362 = vunpack.c.l.b16 %v2227
  %v2363 = vunpack.c.l.b16 %v2228
  %v2364 = vunpack.c.l.b16 %v2229
  %v2365 = vunpack.c.l.b16 %v2230
  %v2366 = vunpack.c.l.b16 %v2231
  %v2367 = vunpack.c.l.b16 %v2232
  %v2368 = vunpack.c.l.b16 %v2233
  %v2369 = vunpack.c.l.b16 %v2234
  %v2370 = vunpack.c.l.b16 %v2235
  %v2371 = vunpack.c.l.b16 %v2236
  %v2372 = vunpack.c.l.b16 %v2237
  %v2373 = vunpack.c.l.b16 %v2238
  %v2374 = vunpack.c.l.b16 %v2239
  %v2375 = vunpack.c.l.b16 %v2240
  %v2376 = vunpack.c.l.b16 %v2241
  %v2377 = vunpack.c.l.b16 %v2242
  %v2378 = vunpack.c.l.b16 %v2243
  %v2379 = vunpack.c.l.b16 %v2244
  %v2380 = vunpack.c.l.b16 %v2245
  %v2381 = vunpack.c.l.b16 %v2246
  %v2382 = vunpack.c.l.b16 %v2247
  %v2383 = vunpack.c.l.b16 %v2248
  %v2384 = vunpack.c.l.b16 %v2249
  %v2385 = vunpack.c.l.b16 %v2250
  %v2386 = vunpack.c.l.b16 %v2251
  %v2387 = vunpack.c.l.b16 %v2252
  %v2388 = vunpack.c.l.b16 %v2253
  %v2389 = vunpack.c.l.b16 %v2254
  %v2390 = vunpack.c.l.b16 %v2255
  %v2391 = vunpack.c.l.b16 %v2256
  %v2392 = vunpack.c.l.b16 %v2257
  %v2393 = vunpack.c.l.b16 %v2258
  %v2394 = vunpack.c.l.b16 %v2259
  %v2395 = vunpack.c.l.b16 %v2260
  %v2396 = vpack.c.b16 %v2333, %v2332
  %v2397 = vpack.c.b16 %v2335, %v2334
  %v2398 = vpack.c.b16 %v2337, %v2336
  %v2399 = vpack.c.b16 %v2339, %v2338
  %v2400 = vpack.c.b16 %v2341, %v2340
  %v2401 = vpack.c.b16 %v2343, %v2342
  %v2402 = vpack.c.b16 %v2345, %v2344
  %v2403 = vpack.c.b16 %v2347, %v2346
  %v2404 = vpack.c.b16 %v2349, %v2348
  %v2405 = vpack.c.b16 %v2351, %v2350
  %v2406 = vpack.c.b16 %v2353, %v2352
  %v2407 = vpack.c.b16 %v2355, %v2354
  %v2408 = vpack.c.b16 %v2357, %v2356
  %v2409 = vpack.c.b16 %v2359, %v2358
  %v2410 = vpack.c.b16 %v2361, %v2360
  %v2411 = vpack.c.b16 %v2363, %v2362
  %v2412 = vpack.c.b16 %v2365, %v2364
  %v2413 = vpack.c.b16 %v2367, %v2366
  %v2414 = vpack.c.b16 %v2369, %v2368
  %v2415 = vpack.c.b16 %v2371, %v2370
  %v2416 = vpack.c.b16 %v2373, %v2372
  %v2417 = vpack.c.b16 %v2375, %v2374
  %v2418 = vpack.c.b16 %v2377, %v2376
  %v2419 = vpack.c.b16 %v2379, %v2378
  %v2420 = vpack.c.b16 %v2381, %v2380
  %v2421 = vpack.c.b16 %v2383, %v2382
  %v2422 = vpack.c.b16 %v2385, %v2384
  %v2423 = vpack.c.b16 %v2387, %v2386
  %v2424 = vpack.c.b16 %v2389, %v2388
  %v2425 = vpack.c.b16 %v2391, %v2390
  %v2426 = vpack.c.b16 %v2393, %v2392
  %v2427 = vpack.c.b16 %v2395, %v2394
  %2460 = vmatprep.subr.bf16.mxu0 0
  %2461 = vmatpush1.bf16.msra.mxu0 %v2396
  %2462 = vmatprep.subr.bf16.mxu0 0
  %2463 = vmatpush1.bf16.msra.mxu0 %v2397
  %2464 = vmatprep.subr.bf16.mxu0 0
  %2465 = vmatpush1.bf16.msra.mxu0 %v2398
  %2466 = vmatprep.subr.bf16.mxu0 0
  %2467 = vmatpush1.bf16.msra.mxu0 %v2399
  %2468 = vmatprep.subr.bf16.mxu0 0
  %2469 = vmatpush1.bf16.msra.mxu0 %v2400
  %2470 = vmatprep.subr.bf16.mxu0 0
  %2471 = vmatpush1.bf16.msra.mxu0 %v2401
  %2472 = vmatprep.subr.bf16.mxu0 0
  %2473 = vmatpush1.bf16.msra.mxu0 %v2402
  %2474 = vmatprep.subr.bf16.mxu0 0
  %2475 = vmatpush1.bf16.msra.mxu0 %v2403
  %2476 = vmatprep.subr.bf16.mxu0 0
  %2477 = vmatpush1.bf16.msra.mxu0 %v2404
  %2478 = vmatprep.subr.bf16.mxu0 0
  %2479 = vmatpush1.bf16.msra.mxu0 %v2405
  %2480 = vmatprep.subr.bf16.mxu0 0
  %2481 = vmatpush1.bf16.msra.mxu0 %v2406
  %2482 = vmatprep.subr.bf16.mxu0 0
  %2483 = vmatpush1.bf16.msra.mxu0 %v2407
  %2484 = vmatprep.subr.bf16.mxu0 0
  %2485 = vmatpush1.bf16.msra.mxu0 %v2408
  %2486 = vmatprep.subr.bf16.mxu0 0
  %2487 = vmatpush1.bf16.msra.mxu0 %v2409
  %2488 = vmatprep.subr.bf16.mxu0 0
  %2489 = vmatpush1.bf16.msra.mxu0 %v2410
  %2490 = vmatprep.subr.bf16.mxu0 0
  %2491 = vmatpush1.bf16.msra.mxu0 %v2411
  %2492 = vmatprep.mubr.bf16.mxu0 %v2194
  %2493 = vmatmul.mubr.bf16.gmra.mrb[0].mxu0 %v2193
  %v2494 = vpop.f32.mrb[0].mxu0
  %v2495 = vadd.f32 %v2266, %v2494
  %v2496 = vpop.f32.mrb[0].mxu0
  %v2497 = vpop.f32.mrb[0].mxu0
  %v2498 = vadd.f32 %v2266, %v2497
  %v2499 = vpop.f32.mrb[0].mxu0
  %2500 = vdwg.mxu0
  %2501 = vmatprep.subr.bf16.mxu0 0
  %2502 = vmatpush1.bf16.msra.mxu0 %v2412
  %2503 = vmatprep.subr.bf16.mxu0 0
  %2504 = vmatpush1.bf16.msra.mxu0 %v2413
  %2505 = vmatprep.subr.bf16.mxu0 0
  %2506 = vmatpush1.bf16.msra.mxu0 %v2414
  %2507 = vmatprep.subr.bf16.mxu0 0
  %2508 = vmatpush1.bf16.msra.mxu0 %v2415
  %2509 = vmatprep.subr.bf16.mxu0 0
  %2510 = vmatpush1.bf16.msra.mxu0 %v2416
  %2511 = vmatprep.subr.bf16.mxu0 0
  %2512 = vmatpush1.bf16.msra.mxu0 %v2417
  %2513 = vmatprep.subr.bf16.mxu0 0
  %2514 = vmatpush1.bf16.msra.mxu0 %v2418
  %2515 = vmatprep.subr.bf16.mxu0 0
  %2516 = vmatpush1.bf16.msra.mxu0 %v2419
  %2517 = vmatprep.subr.bf16.mxu0 0
  %2518 = vmatpush1.bf16.msra.mxu0 %v2420
  %2519 = vmatprep.subr.bf16.mxu0 0
  %2520 = vmatpush1.bf16.msra.mxu0 %v2421
  %2521 = vmatprep.subr.bf16.mxu0 0
  %2522 = vmatpush1.bf16.msra.mxu0 %v2422
  %2523 = vmatprep.subr.bf16.mxu0 0
  %2524 = vmatpush1.bf16.msra.mxu0 %v2423
  %2525 = vmatprep.subr.bf16.mxu0 0
  %2526 = vmatpush1.bf16.msra.mxu0 %v2424
  %2527 = vmatprep.subr.bf16.mxu0 0
  %2528 = vmatpush1.bf16.msra.mxu0 %v2425
  %2529 = vmatprep.subr.bf16.mxu0 0
  %2530 = vmatpush1.bf16.msra.mxu0 %v2426
  %2531 = vmatprep.subr.bf16.mxu0 0
  %2532 = vmatpush1.bf16.msra.mxu0 %v2427
  %2533 = vmatprep.mubr.bf16.mxu0 %v2196
  %2534 = vmatmul.mubr.bf16.gmra.mrb[0].mxu0 %v2195
  %v2535 = vpop.f32.mrb[0].mxu0
  %v2536 = vadd.f32 %v2495, %v2535
  %v2537 = vpop.f32.mrb[0].mxu0
  %v2538 = vpop.f32.mrb[0].mxu0
  %v2539 = vadd.f32 %v2498, %v2538
  %v2540 = vpop.f32.mrb[0].mxu0
  %2541 = vdwg.mxu0
  %2542 = vst [vmem:[%s12] sm:$0xff] %v2536
  %2543 = vst [vmem:[%s12 + $0x8] sm:$0xff] %v2539
  %v2548 = vunpack.c.l.b16 %v2193
  %v2549 = vunpack.c.l.b16 %v2194
  %v2550 = vunpack.c.l.b16 %v2195
  %v2551 = vunpack.c.l.b16 %v2196
  %v2552 = vunpack.c.h.b16 %v2193
  %v2553 = vunpack.c.h.b16 %v2194
  %v2554 = vunpack.c.h.b16 %v2195
  %v2555 = vunpack.c.h.b16 %v2196
  %v2556 = vpack.c.b16 %v2549, %v2548
  %v2557 = vpack.c.b16 %v2551, %v2550
  %v2558 = vpack.c.b16 %v2553, %v2552
  %v2559 = vpack.c.b16 %v2555, %v2554
  %2564 = vst [vmem:[%s13] sm:$0xff] %v2556
  %2565 = vst [vmem:[%s13 + $0x8] sm:$0xff] %v2557
  %2566 = vst [vmem:[%s13 + $0x10] sm:$0xff] %v2558
  %2567 = vst [vmem:[%s13 + $0x18] sm:$0xff] %v2559
  %v2568 = vpack.c.bf16 %v2189, %v2185
  %v2569 = vpack.c.bf16 %v2190, %v2186
  %v2570 = vpack.c.bf16 %v2191, %v2187
  %v2571 = vpack.c.bf16 %v2192, %v2188
  %v2576 = vunpack.c.l.b16 %v2568
  %v2577 = vunpack.c.l.b16 %v2569
  %v2578 = vunpack.c.l.b16 %v2570
  %v2579 = vunpack.c.l.b16 %v2571
  %v2580 = vunpack.c.h.b16 %v2568
  %v2581 = vunpack.c.h.b16 %v2569
  %v2582 = vunpack.c.h.b16 %v2570
  %v2583 = vunpack.c.h.b16 %v2571
  %v2584 = vpack.c.b16 %v2577, %v2576
  %v2585 = vpack.c.b16 %v2579, %v2578
  %v2586 = vpack.c.b16 %v2581, %v2580
  %v2587 = vpack.c.b16 %v2583, %v2582
  %2592 = vst [vmem:[%s14] sm:$0xff] %v2584
  %2593 = vst [vmem:[%s14 + $0x8] sm:$0xff] %v2585
  %2594 = vst [vmem:[%s14 + $0x10] sm:$0xff] %v2586
  %2595 = vst [vmem:[%s14 + $0x18] sm:$0xff] %v2587
  // Predicated region
  $region50: #{enhanced_clip_forward.1} parent=0 // pred_check
    _
  $region51: #{enhanced_clip_forward.1} parent=0 // pred_check_branch
    %2597 = sbr.rel (0) target = $region53
  $region52: #{enhanced_clip_forward.1} parent=0 // pred_region
    _
  $region53: #{enhanced_clip_forward.1} parent=0 // pred_fallthru
    _
  // Predicated region
  $region54: #{enhanced_clip_forward.1} parent=0 // pred_check
    _
  $region55: #{enhanced_clip_forward.1} parent=0 // pred_check_branch
    %2599 = sbr.rel (0) target = $region57
  $region56: #{enhanced_clip_forward.1} parent=0 // pred_region
    _
  $region57: #{enhanced_clip_forward.1} parent=0 // pred_fallthru
    _
  // Predicated region
  $region58: #{enhanced_clip_forward.1} parent=0 // pred_check
    _
  $region59: #{enhanced_clip_forward.1} parent=0 // pred_check_branch
    %2601 = sbr.rel (0) target = $region61
  $region60: #{enhanced_clip_forward.1} parent=0 // pred_region
    _
  $region61: #{enhanced_clip_forward.1} parent=0 // pred_fallthru
    _
  // Predicated region
  $region62: #{enhanced_clip_forward.1} parent=0 // pred_check
    _
  $region63: #{enhanced_clip_forward.1} parent=0 // pred_check_branch
    %2603 = sbr.rel (0) target = $region65
  $region64: #{enhanced_clip_forward.1} parent=0 // pred_region
    _
  $region65: #{enhanced_clip_forward.1} parent=0 // pred_fallthru
    _
  // Predicated region
  $region66: #{enhanced_clip_forward.1} parent=0 // pred_check
    _
  $region67: #{enhanced_clip_forward.1} parent=0 // pred_check_branch
    %2605 = sbr.rel (0) target = $region69
  $region68: #{enhanced_clip_forward.1} parent=0 // pred_region
    _
  $region69: #{enhanced_clip_forward.1} parent=0 // pred_fallthru
    _
  // Predicated region
  $region70: #{enhanced_clip_forward.1} parent=0 // pred_check
    _
  $region71: #{enhanced_clip_forward.1} parent=0 // pred_check_branch
    %2607 = sbr.rel (0) target = $region73
  $region72: #{enhanced_clip_forward.1} parent=0 // pred_region
    _
  $region73: #{enhanced_clip_forward.1} parent=0 // pred_fallthru
    _

</llo_original>
